<compile_context>
chip_gen: v7x
topology: tpu7x:2x2x1
jax: 0.10.0
libtpu: 0.0.40
codegen_flags: <defaults>
</compile_context>

<pallas_src>
import functools

import jax
import jax.numpy as jnp
from jax import lax
from jax.experimental import pallas as pl
from jax.experimental.pallas import tpu as pltpu

# Large-but-safe pad coordinate: squared pad<->real distances are ~1e16 (finite
# in f32) so padded rows/cols can never win a min over real points.
_PAD_VAL = 1e8


def _round_up(x, m):
    return ((x + m - 1) // m) * m


def _chamfer_kernel(x_ref, yt_ref, d1_ref, d2_ref, d1_scr, *, tm):
    """One (batch, core-split, N-tile) grid step.

    x_ref:  (1, tn, D)     query points for this N tile (natural layout)
    yt_ref: (1, D, M_pad)  all target points, transposed (coords lane-dense)
    d1_ref: (1, 1, tn)     output tile: min_m ||x_n - y_m||^2 (lane-dense)
    d2_ref: (1, 1, M_pad)  per-(batch, core-split) running min over n;
                           resident across the innermost (N-tile) grid axis
    d1_scr: (tn, 128)      VMEM scratch: per-lane partial minima for dist1
    """
    nt = pl.program_id(2)

    # Initialize the dist2 accumulator once per (batch, core-split) slab.
    @pl.when(nt == 0)
    def _():
        d2_ref[...] = jnp.full(d2_ref.shape, jnp.inf, d2_ref.dtype)

    x = x_ref[0].astype(jnp.float32)                 # (tn, D)
    tn, dim = x.shape
    m_pad = yt_ref.shape[2]
    num_m_tiles = m_pad // tm
    lanes = tm // 128
    sub_groups = tn // 8

    # Hoist loop-invariant x-side slices out of the M loop (JAX does not CSE
    # slices / broadcasts inside the traced loop body).
    x_coords = [x[:, k:k + 1] for k in range(dim)]   # each (tn, 1)

    # dist1 per-lane running min: reset every grid step (scratch persists).
    d1_scr[...] = jnp.full(d1_scr.shape, jnp.inf, d1_scr.dtype)

    def m_step(j, carry):
        off = pl.multiple_of(j * tm, tm)
        yblk = yt_ref[0, :, pl.ds(off, tm)].astype(jnp.float32)    # (D, tm)

        # Exact per-coordinate squared distances: pure VPU.  (No MXU: at D=3 a
        # matmul is >97% zero padding and numerically worse.)
        d = None
        for k in range(dim):
            dk = x_coords[k] - yblk[k:k + 1, :]                    # (tn, tm)
            d = dk * dk if d is None else d + dk * dk

        # dist2 (min over n), two-stage:
        #   stage 1: elementwise VPU min of the tn/8 sublane groups -> (8, tm)
        #   stage 2: one 8-sublane XLU reduce -> (tm,), fold into accumulator.
        d_grp = d[0:8, :]
        for s in range(1, sub_groups):
            d_grp = jnp.minimum(d_grp, d[s * 8:(s + 1) * 8, :])
        col_min = jnp.min(d_grp, axis=0)                           # (tm,)
        cur = d2_ref[0, 0, pl.ds(off, tm)]
        d2_ref[0, 0, pl.ds(off, tm)] = jnp.minimum(cur, col_min)

        # dist1 (min over m): fold this tile's lane groups into the (tn, 128)
        # running min with elementwise VPU mins; the cross-lane XLU reduce is
        # deferred until after the loop.
        fold = d[:, 0:128]
        for l in range(1, lanes):
            fold = jnp.minimum(fold, d[:, l * 128:(l + 1) * 128])
        d1_scr[...] = jnp.minimum(d1_scr[...], fold)
        return carry

    unroll = num_m_tiles if num_m_tiles <= 8 else 4
    lax.fori_loop(0, num_m_tiles, m_step, 0, unroll=unroll)

    # Single cross-lane reduce + single lane-dense store per N tile.
    d1_ref[0, 0, :] = jnp.min(d1_scr[...], axis=1)


def chamfer_dist(xyz1, xyz2):
    """Pallas TPU chamfer distance forward.

    xyz1: (B, N, D) f32, xyz2: (B, M, D) f32
    returns (dist1 (B, N) f32, dist2 (B, M) f32)
    """
    B, N, D = xyz1.shape
    B2, M, D2 = xyz2.shape
    assert B == B2 and D == D2

    # --- tile selection: keep the (tn, tm) f32 distance tile register-resident
    # (128 x 256 f32 = 32 vregs); dist1 carry lives in a small VMEM scratch. ---
    if N >= 128:
        n_pad = _round_up(N, 128)
        tn = 128
    else:
        n_pad = _round_up(N, 8)
        tn = n_pad
    m_pad = _round_up(M, 128)
    tm = 256 if m_pad % 256 == 0 else 128

    # v7x megacore: with B == 1 the batch axis cannot be sharded across the two
    # TensorCores, so split the N-tile axis into a leading parallel factor of 2
    # and give each core its own dist2 partial slab (combined below with min).
    n_tiles = n_pad // tn
    n_split = 2 if (B == 1 and n_tiles >= 2 and n_tiles % 2 == 0) else 1
    inner = n_tiles // n_split

    # --- pad + relayout once in the wrapper (outside the kernel) ---
    xp = xyz1.astype(jnp.float32)
    if n_pad != N:
        xp = jnp.pad(xp, ((0, 0), (0, n_pad - N), (0, 0)),
                     constant_values=_PAD_VAL)
    yt = jnp.transpose(xyz2.astype(jnp.float32), (0, 2, 1))        # (B, D, M)
    if m_pad != M:
        yt = jnp.pad(yt, ((0, 0), (0, 0), (0, m_pad - M)),
                     constant_values=_PAD_VAL)

    # VMEM budget for the resident-M design (double-buffered blocks).
    est = 2 * (tn * 128 * 4          # x block (D lane-padded to 128)
               + 8 * m_pad * 4       # yt block (D sublane-padded to 8)
               + 8 * 128 * 4         # d1 block
               + 8 * m_pad * 4)      # d2 block
    vmem_limit = max(32 * 1024 * 1024, est + (8 << 20))
    assert vmem_limit <= 64 * 1024 * 1024, (
        "point cloud too large for the resident-M design on v7x; chunk M")
    # TODO(synk): for very large M, switch xyz2 to memory_space=pl.ANY and
    # double-buffer (D, tm) chunks with pltpu.make_async_copy so VMEM use stays
    # O(tm) independent of M.

    kernel = functools.partial(_chamfer_kernel, tm=tm)

    d1, d2 = pl.pallas_call(
        kernel,
        out_shape=(
            jax.ShapeDtypeStruct((B, 1, n_pad), jnp.float32),
            jax.ShapeDtypeStruct((B, n_split, m_pad), jnp.float32),
        ),
        grid_spec=pltpu.PrefetchScalarGridSpec(
            num_scalar_prefetch=0,
            grid=(B, n_split, inner),
            in_specs=[
                pl.BlockSpec((1, tn, D), lambda b, c, i: (b, c * inner + i, 0)),
                pl.BlockSpec((1, D, m_pad), lambda b, c, i: (b, 0, 0)),
            ],
            out_specs=[
                pl.BlockSpec((1, 1, tn), lambda b, c, i: (b, 0, c * inner + i)),
                pl.BlockSpec((1, 1, m_pad), lambda b, c, i: (b, c, 0)),
            ],
            scratch_shapes=[pltpu.VMEM((tn, 128), jnp.float32)],
        ),
        compiler_params=pltpu.CompilerParams(
            dimension_semantics=("parallel", "parallel", "arbitrary"),
            vmem_limit_bytes=vmem_limit,
        ),
    )(xp, yt)

    dist1 = d1[:, 0, :N]
    dist2 = jnp.min(d2, axis=1)[:, :M]
    return dist1, dist2


def _chamfer_ref(xyz1, xyz2):
    # pure-JAX reference for sanity check
    diff = xyz1[:, :, None, :] - xyz2[:, None, :, :]    # (B, N, M, D)
    sq = jnp.sum(diff * diff, axis=-1)                  # (B, N, M)
    return jnp.min(sq, axis=2), jnp.min(sq, axis=1)


# TODO(synk): backward pass (chamfer.backward) and the argmin indices idx1/idx2
# (only needed for autograd) are not implemented; forward returns (dist1, dist2)
# exactly like the PyTorch module's forward.

if __name__ == "__main__":
    key = jax.random.PRNGKey(0)
    k1, k2, k3, k4 = jax.random.split(key, 4)

    # Case 1: multi-batch, ragged N and M.  Exercises multiple N tiles
    # (300 -> 384), the tm=256 path with M padding (500 -> 512), and the
    # dist2 accumulator across N tiles.
    B, N, M, D = 2, 300, 500, 3
    xyz1 = jax.random.normal(k1, (B, N, D), dtype=jnp.float32)
    xyz2 = jax.random.normal(k2, (B, M, D), dtype=jnp.float32)
    ref1, ref2 = _chamfer_ref(xyz1, xyz2)
    d1, d2 = chamfer_dist(xyz1, xyz2)
    jax.block_until_ready((d1, d2))
    assert d1.shape == (B, N) and d2.shape == (B, M)
    assert jnp.allclose(d1, ref1, atol=1e-5, rtol=1e-5)
    assert jnp.allclose(d2, ref2, atol=1e-5, rtol=1e-5)

    # Case 2: B == 1.  Exercises the megacore N-axis split (two dist2 partial
    # slabs merged in the wrapper) and the tm=128 path.
    N1, M1 = 256, 384
    a = jax.random.normal(k3, (1, N1, D), dtype=jnp.float32)
    b = jax.random.normal(k4, (1, M1, D), dtype=jnp.float32)
    r1, r2 = _chamfer_ref(a, b)
    e1, e2 = chamfer_dist(a, b)
    jax.block_until_ready((e1, e2))
    assert e1.shape == (1, N1) and e2.shape == (1, M1)
    assert jnp.allclose(e1, r1, atol=1e-5, rtol=1e-5)
    assert jnp.allclose(e2, r2, atol=1e-5, rtol=1e-5)

    print("KERNEL_OK")
</pallas_src>

<mosaic_0001>
module attributes {stable_mosaic.version = 11 : i64} {
  func.func @_chamfer_kernel(%arg0: i32, %arg1: i32, %arg2: i32, %arg3: memref<1x128x3xf32, #tpu.memory_space<vmem>>, %arg4: memref<1x3x512xf32, #tpu.memory_space<vmem>>, %arg5: memref<1x1x128xf32, #tpu.memory_space<vmem>>, %arg6: memref<1x1x512xf32, #tpu.memory_space<vmem>>, %arg7: memref<128x128xf32, #tpu.memory_space<vmem>>) attributes {dimension_semantics = [#tpu.dimension_semantics<parallel>, #tpu.dimension_semantics<parallel>, #tpu.dimension_semantics<arbitrary>], iteration_bounds = array<i64: 2, 1, 3>, scalar_prefetch = 0 : i64, scratch_operands = 1 : i64, tpu.core_type = #tpu.core_type<tc>, window_params = [{transform_indices = @transform_0, window_bounds = array<i64: 1, 128, 3>}, {transform_indices = @transform_1, window_bounds = array<i64: 1, 3, 512>}, {transform_indices = @transform_2, window_bounds = array<i64: 1, 1, 128>}, {transform_indices = @transform_3, window_bounds = array<i64: 1, 1, 512>}]} {
    %c0_i32 = arith.constant 0 : i32
    %0 = arith.cmpi eq, %arg2, %c0_i32 : i32
    %1 = arith.extui %0 : i1 to i32
    %c0_i32_0 = arith.constant 0 : i32
    %2 = arith.cmpi ne, %1, %c0_i32_0 : i32
    scf.if %2 {
      %cst_35 = arith.constant 0x7F800000 : f32
      %151 = vector.broadcast %cst_35 : f32 to vector<1x1x512xf32>
      %c0_36 = arith.constant 0 : index
      %c0_37 = arith.constant 0 : index
      %c0_38 = arith.constant 0 : index
      %152 = vector.load %arg6[%c0_36, %c0_37, %c0_38] : memref<1x1x512xf32, #tpu.memory_space<vmem>>, vector<1x1x512xf32>
      tpu.vector_store %arg6[%c0_36, %c0_37, %c0_38], %151 {strides = array<i32>} : memref<1x1x512xf32, #tpu.memory_space<vmem>>, vector<1x1x512xf32>,
    } else {
    }
    %c0 = arith.constant 0 : index
    %c0_1 = arith.constant 0 : index
    %c0_2 = arith.constant 0 : index
    %3 = vector.load %arg3[%c0, %c0_1, %c0_2] : memref<1x128x3xf32, #tpu.memory_space<vmem>>, vector<1x128x3xf32>
    %4 = vector.shape_cast %3 : vector<1x128x3xf32> to vector<128x3xf32>
    %5 = vector.extract_strided_slice %4 {offsets = [0, 0], sizes = [128, 1], strides = [1, 1]} : vector<128x3xf32> to vector<128x1xf32>
    %6 = vector.extract_strided_slice %4 {offsets = [0, 1], sizes = [128, 1], strides = [1, 1]} : vector<128x3xf32> to vector<128x1xf32>
    %7 = vector.extract_strided_slice %4 {offsets = [0, 2], sizes = [128, 1], strides = [1, 1]} : vector<128x3xf32> to vector<128x1xf32>
    %cst = arith.constant 0x7F800000 : f32
    %8 = vector.broadcast %cst : f32 to vector<128x128xf32>
    %c0_3 = arith.constant 0 : index
    %c0_4 = arith.constant 0 : index
    %9 = vector.load %arg7[%c0_3, %c0_4] : memref<128x128xf32, #tpu.memory_space<vmem>>, vector<128x128xf32>
    tpu.vector_store %arg7[%c0_3, %c0_4], %8 {strides = array<i32>} : memref<128x128xf32, #tpu.memory_space<vmem>>, vector<128x128xf32>,
    %c0_i32_5 = arith.constant 0 : i32
    %c256_i32 = arith.constant 256 : i32
    %10 = arith.muli %c0_i32_5, %c256_i32 : i32
    %11 = tpu.assume_multiple %10, 256 : i32
    %c0_6 = arith.constant 0 : index
    %c0_7 = arith.constant 0 : index
    %12 = arith.index_cast %11 : i32 to index
    %13 = vector.load %arg4[%c0_6, %c0_7, %12] : memref<1x3x512xf32, #tpu.memory_space<vmem>>, vector<1x3x256xf32>
    %14 = vector.shape_cast %13 : vector<1x3x256xf32> to vector<3x256xf32>
    %15 = vector.extract_strided_slice %14 {offsets = [0, 0], sizes = [1, 256], strides = [1, 1]} : vector<3x256xf32> to vector<1x256xf32>
    %16 = vector.broadcast %5 : vector<128x1xf32> to vector<128x256xf32>
    %17 = vector.broadcast %15 : vector<1x256xf32> to vector<128x256xf32>
    %18 = arith.subf %16, %17 : vector<128x256xf32>
    %19 = arith.mulf %18, %18 : vector<128x256xf32>
    %20 = vector.extract_strided_slice %14 {offsets = [1, 0], sizes = [1, 256], strides = [1, 1]} : vector<3x256xf32> to vector<1x256xf32>
    %21 = vector.broadcast %6 : vector<128x1xf32> to vector<128x256xf32>
    %22 = vector.broadcast %20 : vector<1x256xf32> to vector<128x256xf32>
    %23 = arith.subf %21, %22 : vector<128x256xf32>
    %24 = arith.mulf %23, %23 : vector<128x256xf32>
    %25 = arith.addf %19, %24 : vector<128x256xf32>
    %26 = vector.extract_strided_slice %14 {offsets = [2, 0], sizes = [1, 256], strides = [1, 1]} : vector<3x256xf32> to vector<1x256xf32>
    %27 = vector.broadcast %7 : vector<128x1xf32> to vector<128x256xf32>
    %28 = vector.broadcast %26 : vector<1x256xf32> to vector<128x256xf32>
    %29 = arith.subf %27, %28 : vector<128x256xf32>
    %30 = arith.mulf %29, %29 : vector<128x256xf32>
    %31 = arith.addf %25, %30 : vector<128x256xf32>
    %32 = vector.extract_strided_slice %31 {offsets = [0, 0], sizes = [8, 256], strides = [1, 1]} : vector<128x256xf32> to vector<8x256xf32>
    %33 = vector.extract_strided_slice %31 {offsets = [8, 0], sizes = [8, 256], strides = [1, 1]} : vector<128x256xf32> to vector<8x256xf32>
    %34 = arith.minimumf %32, %33 : vector<8x256xf32>
    %35 = vector.extract_strided_slice %31 {offsets = [16, 0], sizes = [8, 256], strides = [1, 1]} : vector<128x256xf32> to vector<8x256xf32>
    %36 = arith.minimumf %34, %35 : vector<8x256xf32>
    %37 = vector.extract_strided_slice %31 {offsets = [24, 0], sizes = [8, 256], strides = [1, 1]} : vector<128x256xf32> to vector<8x256xf32>
    %38 = arith.minimumf %36, %37 : vector<8x256xf32>
    %39 = vector.extract_strided_slice %31 {offsets = [32, 0], sizes = [8, 256], strides = [1, 1]} : vector<128x256xf32> to vector<8x256xf32>
    %40 = arith.minimumf %38, %39 : vector<8x256xf32>
    %41 = vector.extract_strided_slice %31 {offsets = [40, 0], sizes = [8, 256], strides = [1, 1]} : vector<128x256xf32> to vector<8x256xf32>
    %42 = arith.minimumf %40, %41 : vector<8x256xf32>
    %43 = vector.extract_strided_slice %31 {offsets = [48, 0], sizes = [8, 256], strides = [1, 1]} : vector<128x256xf32> to vector<8x256xf32>
    %44 = arith.minimumf %42, %43 : vector<8x256xf32>
    %45 = vector.extract_strided_slice %31 {offsets = [56, 0], sizes = [8, 256], strides = [1, 1]} : vector<128x256xf32> to vector<8x256xf32>
    %46 = arith.minimumf %44, %45 : vector<8x256xf32>
    %47 = vector.extract_strided_slice %31 {offsets = [64, 0], sizes = [8, 256], strides = [1, 1]} : vector<128x256xf32> to vector<8x256xf32>
    %48 = arith.minimumf %46, %47 : vector<8x256xf32>
    %49 = vector.extract_strided_slice %31 {offsets = [72, 0], sizes = [8, 256], strides = [1, 1]} : vector<128x256xf32> to vector<8x256xf32>
    %50 = arith.minimumf %48, %49 : vector<8x256xf32>
    %51 = vector.extract_strided_slice %31 {offsets = [80, 0], sizes = [8, 256], strides = [1, 1]} : vector<128x256xf32> to vector<8x256xf32>
    %52 = arith.minimumf %50, %51 : vector<8x256xf32>
    %53 = vector.extract_strided_slice %31 {offsets = [88, 0], sizes = [8, 256], strides = [1, 1]} : vector<128x256xf32> to vector<8x256xf32>
    %54 = arith.minimumf %52, %53 : vector<8x256xf32>
    %55 = vector.extract_strided_slice %31 {offsets = [96, 0], sizes = [8, 256], strides = [1, 1]} : vector<128x256xf32> to vector<8x256xf32>
    %56 = arith.minimumf %54, %55 : vector<8x256xf32>
    %57 = vector.extract_strided_slice %31 {offsets = [104, 0], sizes = [8, 256], strides = [1, 1]} : vector<128x256xf32> to vector<8x256xf32>
    %58 = arith.minimumf %56, %57 : vector<8x256xf32>
    %59 = vector.extract_strided_slice %31 {offsets = [112, 0], sizes = [8, 256], strides = [1, 1]} : vector<128x256xf32> to vector<8x256xf32>
    %60 = arith.minimumf %58, %59 : vector<8x256xf32>
    %61 = vector.extract_strided_slice %31 {offsets = [120, 0], sizes = [8, 256], strides = [1, 1]} : vector<128x256xf32> to vector<8x256xf32>
    %62 = arith.minimumf %60, %61 : vector<8x256xf32>
    %cst_8 = arith.constant dense<0x7F800000> : vector<256xf32>
    %63 = vector.multi_reduction <minimumf>, %62, %cst_8 [0] : vector<8x256xf32> to vector<256xf32>
    %c0_9 = arith.constant 0 : index
    %c0_10 = arith.constant 0 : index
    %64 = arith.index_cast %11 : i32 to index
    %65 = vector.load %arg6[%c0_9, %c0_10, %64] : memref<1x1x512xf32, #tpu.memory_space<vmem>>, vector<1x1x256xf32>
    %66 = vector.shape_cast %65 : vector<1x1x256xf32> to vector<256xf32>
    %67 = arith.minimumf %66, %63 : vector<256xf32>
    %c0_11 = arith.constant 0 : index
    %c0_12 = arith.constant 0 : index
    %68 = arith.index_cast %11 : i32 to index
    %69 = vector.load %arg6[%c0_11, %c0_12, %68] : memref<1x1x512xf32, #tpu.memory_space<vmem>>, vector<1x1x256xf32>
    %70 = vector.shape_cast %69 : vector<1x1x256xf32> to vector<256xf32>
    %71 = vector.shape_cast %67 : vector<256xf32> to vector<1x1x256xf32>
    tpu.vector_store %arg6[%c0_11, %c0_12, %68], %71 {strides = array<i32>} : memref<1x1x512xf32, #tpu.memory_space<vmem>>, vector<1x1x256xf32>,
    %72 = vector.extract_strided_slice %31 {offsets = [0, 0], sizes = [128, 128], strides = [1, 1]} : vector<128x256xf32> to vector<128x128xf32>
    %73 = vector.extract_strided_slice %31 {offsets = [0, 128], sizes = [128, 128], strides = [1, 1]} : vector<128x256xf32> to vector<128x128xf32>
    %74 = arith.minimumf %72, %73 : vector<128x128xf32>
    %c0_13 = arith.constant 0 : index
    %c0_14 = arith.constant 0 : index
    %75 = vector.load %arg7[%c0_13, %c0_14] : memref<128x128xf32, #tpu.memory_space<vmem>>, vector<128x128xf32>
    %76 = arith.minimumf %75, %74 : vector<128x128xf32>
    %c0_15 = arith.constant 0 : index
    %c0_16 = arith.constant 0 : index
    %77 = vector.load %arg7[%c0_15, %c0_16] : memref<128x128xf32, #tpu.memory_space<vmem>>, vector<128x128xf32>
    tpu.vector_store %arg7[%c0_15, %c0_16], %76 {strides = array<i32>} : memref<128x128xf32, #tpu.memory_space<vmem>>, vector<128x128xf32>,
    %c1_i32 = arith.constant 1 : i32
    %c256_i32_17 = arith.constant 256 : i32
    %78 = arith.muli %c1_i32, %c256_i32_17 : i32
    %79 = tpu.assume_multiple %78, 256 : i32
    %c0_18 = arith.constant 0 : index
    %c0_19 = arith.constant 0 : index
    %80 = arith.index_cast %79 : i32 to index
    %81 = vector.load %arg4[%c0_18, %c0_19, %80] : memref<1x3x512xf32, #tpu.memory_space<vmem>>, vector<1x3x256xf32>
    %82 = vector.shape_cast %81 : vector<1x3x256xf32> to vector<3x256xf32>
    %83 = vector.extract_strided_slice %82 {offsets = [0, 0], sizes = [1, 256], strides = [1, 1]} : vector<3x256xf32> to vector<1x256xf32>
    %84 = vector.broadcast %5 : vector<128x1xf32> to vector<128x256xf32>
    %85 = vector.broadcast %83 : vector<1x256xf32> to vector<128x256xf32>
    %86 = arith.subf %84, %85 : vector<128x256xf32>
    %87 = arith.mulf %86, %86 : vector<128x256xf32>
    %88 = vector.extract_strided_slice %82 {offsets = [1, 0], sizes = [1, 256], strides = [1, 1]} : vector<3x256xf32> to vector<1x256xf32>
    %89 = vector.broadcast %6 : vector<128x1xf32> to vector<128x256xf32>
    %90 = vector.broadcast %88 : vector<1x256xf32> to vector<128x256xf32>
    %91 = arith.subf %89, %90 : vector<128x256xf32>
    %92 = arith.mulf %91, %91 : vector<128x256xf32>
    %93 = arith.addf %87, %92 : vector<128x256xf32>
    %94 = vector.extract_strided_slice %82 {offsets = [2, 0], sizes = [1, 256], strides = [1, 1]} : vector<3x256xf32> to vector<1x256xf32>
    %95 = vector.broadcast %7 : vector<128x1xf32> to vector<128x256xf32>
    %96 = vector.broadcast %94 : vector<1x256xf32> to vector<128x256xf32>
    %97 = arith.subf %95, %96 : vector<128x256xf32>
    %98 = arith.mulf %97, %97 : vector<128x256xf32>
    %99 = arith.addf %93, %98 : vector<128x256xf32>
    %100 = vector.extract_strided_slice %99 {offsets = [0, 0], sizes = [8, 256], strides = [1, 1]} : vector<128x256xf32> to vector<8x256xf32>
    %101 = vector.extract_strided_slice %99 {offsets = [8, 0], sizes = [8, 256], strides = [1, 1]} : vector<128x256xf32> to vector<8x256xf32>
    %102 = arith.minimumf %100, %101 : vector<8x256xf32>
    %103 = vector.extract_strided_slice %99 {offsets = [16, 0], sizes = [8, 256], strides = [1, 1]} : vector<128x256xf32> to vector<8x256xf32>
    %104 = arith.minimumf %102, %103 : vector<8x256xf32>
    %105 = vector.extract_strided_slice %99 {offsets = [24, 0], sizes = [8, 256], strides = [1, 1]} : vector<128x256xf32> to vector<8x256xf32>
    %106 = arith.minimumf %104, %105 : vector<8x256xf32>
    %107 = vector.extract_strided_slice %99 {offsets = [32, 0], sizes = [8, 256], strides = [1, 1]} : vector<128x256xf32> to vector<8x256xf32>
    %108 = arith.minimumf %106, %107 : vector<8x256xf32>
    %109 = vector.extract_strided_slice %99 {offsets = [40, 0], sizes = [8, 256], strides = [1, 1]} : vector<128x256xf32> to vector<8x256xf32>
    %110 = arith.minimumf %108, %109 : vector<8x256xf32>
    %111 = vector.extract_strided_slice %99 {offsets = [48, 0], sizes = [8, 256], strides = [1, 1]} : vector<128x256xf32> to vector<8x256xf32>
    %112 = arith.minimumf %110, %111 : vector<8x256xf32>
    %113 = vector.extract_strided_slice %99 {offsets = [56, 0], sizes = [8, 256], strides = [1, 1]} : vector<128x256xf32> to vector<8x256xf32>
    %114 = arith.minimumf %112, %113 : vector<8x256xf32>
    %115 = vector.extract_strided_slice %99 {offsets = [64, 0], sizes = [8, 256], strides = [1, 1]} : vector<128x256xf32> to vector<8x256xf32>
    %116 = arith.minimumf %114, %115 : vector<8x256xf32>
    %117 = vector.extract_strided_slice %99 {offsets = [72, 0], sizes = [8, 256], strides = [1, 1]} : vector<128x256xf32> to vector<8x256xf32>
    %118 = arith.minimumf %116, %117 : vector<8x256xf32>
    %119 = vector.extract_strided_slice %99 {offsets = [80, 0], sizes = [8, 256], strides = [1, 1]} : vector<128x256xf32> to vector<8x256xf32>
    %120 = arith.minimumf %118, %119 : vector<8x256xf32>
    %121 = vector.extract_strided_slice %99 {offsets = [88, 0], sizes = [8, 256], strides = [1, 1]} : vector<128x256xf32> to vector<8x256xf32>
    %122 = arith.minimumf %120, %121 : vector<8x256xf32>
    %123 = vector.extract_strided_slice %99 {offsets = [96, 0], sizes = [8, 256], strides = [1, 1]} : vector<128x256xf32> to vector<8x256xf32>
    %124 = arith.minimumf %122, %123 : vector<8x256xf32>
    %125 = vector.extract_strided_slice %99 {offsets = [104, 0], sizes = [8, 256], strides = [1, 1]} : vector<128x256xf32> to vector<8x256xf32>
    %126 = arith.minimumf %124, %125 : vector<8x256xf32>
    %127 = vector.extract_strided_slice %99 {offsets = [112, 0], sizes = [8, 256], strides = [1, 1]} : vector<128x256xf32> to vector<8x256xf32>
    %128 = arith.minimumf %126, %127 : vector<8x256xf32>
    %129 = vector.extract_strided_slice %99 {offsets = [120, 0], sizes = [8, 256], strides = [1, 1]} : vector<128x256xf32> to vector<8x256xf32>
    %130 = arith.minimumf %128, %129 : vector<8x256xf32>
    %cst_20 = arith.constant dense<0x7F800000> : vector<256xf32>
    %131 = vector.multi_reduction <minimumf>, %130, %cst_20 [0] : vector<8x256xf32> to vector<256xf32>
    %c0_21 = arith.constant 0 : index
    %c0_22 = arith.constant 0 : index
    %132 = arith.index_cast %79 : i32 to index
    %133 = vector.load %arg6[%c0_21, %c0_22, %132] : memref<1x1x512xf32, #tpu.memory_space<vmem>>, vector<1x1x256xf32>
    %134 = vector.shape_cast %133 : vector<1x1x256xf32> to vector<256xf32>
    %135 = arith.minimumf %134, %131 : vector<256xf32>
    %c0_23 = arith.constant 0 : index
    %c0_24 = arith.constant 0 : index
    %136 = arith.index_cast %79 : i32 to index
    %137 = vector.load %arg6[%c0_23, %c0_24, %136] : memref<1x1x512xf32, #tpu.memory_space<vmem>>, vector<1x1x256xf32>
    %138 = vector.shape_cast %137 : vector<1x1x256xf32> to vector<256xf32>
    %139 = vector.shape_cast %135 : vector<256xf32> to vector<1x1x256xf32>
    tpu.vector_store %arg6[%c0_23, %c0_24, %136], %139 {strides = array<i32>} : memref<1x1x512xf32, #tpu.memory_space<vmem>>, vector<1x1x256xf32>,
    %140 = vector.extract_strided_slice %99 {offsets = [0, 0], sizes = [128, 128], strides = [1, 1]} : vector<128x256xf32> to vector<128x128xf32>
    %141 = vector.extract_strided_slice %99 {offsets = [0, 128], sizes = [128, 128], strides = [1, 1]} : vector<128x256xf32> to vector<128x128xf32>
    %142 = arith.minimumf %140, %141 : vector<128x128xf32>
    %c0_25 = arith.constant 0 : index
    %c0_26 = arith.constant 0 : index
    %143 = vector.load %arg7[%c0_25, %c0_26] : memref<128x128xf32, #tpu.memory_space<vmem>>, vector<128x128xf32>
    %144 = arith.minimumf %143, %142 : vector<128x128xf32>
    %c0_27 = arith.constant 0 : index
    %c0_28 = arith.constant 0 : index
    %145 = vector.load %arg7[%c0_27, %c0_28] : memref<128x128xf32, #tpu.memory_space<vmem>>, vector<128x128xf32>
    tpu.vector_store %arg7[%c0_27, %c0_28], %144 {strides = array<i32>} : memref<128x128xf32, #tpu.memory_space<vmem>>, vector<128x128xf32>,
    %c2_i32 = arith.constant 2 : i32
    %c0_29 = arith.constant 0 : index
    %c0_30 = arith.constant 0 : index
    %146 = vector.load %arg7[%c0_29, %c0_30] : memref<128x128xf32, #tpu.memory_space<vmem>>, vector<128x128xf32>
    %cst_31 = arith.constant dense<0x7F800000> : vector<128xf32>
    %147 = vector.multi_reduction <minimumf>, %146, %cst_31 [1] : vector<128x128xf32> to vector<128xf32>
    %c0_32 = arith.constant 0 : index
    %c0_33 = arith.constant 0 : index
    %c0_34 = arith.constant 0 : index
    %148 = vector.load %arg5[%c0_32, %c0_33, %c0_34] : memref<1x1x128xf32, #tpu.memory_space<vmem>>, vector<1x1x128xf32>
    %149 = vector.shape_cast %148 : vector<1x1x128xf32> to vector<128xf32>
    %150 = vector.shape_cast %147 : vector<128xf32> to vector<1x1x128xf32>
    tpu.vector_store %arg5[%c0_32, %c0_33, %c0_34], %150 {strides = array<i32>} : memref<1x1x128xf32, #tpu.memory_space<vmem>>, vector<1x1x128xf32>,
    return
  }
  func.func @transform_0(%arg0: i32, %arg1: i32, %arg2: i32) -> (i32, i32, i32) {
    %c3_i32 = arith.constant 3 : i32
    %0 = arith.muli %arg1, %c3_i32 : i32
    %1 = arith.addi %0, %arg2 : i32
    %c0_i32 = arith.constant 0 : i32
    %c0_i32_0 = arith.constant 0 : i32
    return %arg0, %1, %c0_i32 : i32, i32, i32
  }
  func.func @transform_1(%arg0: i32, %arg1: i32, %arg2: i32) -> (i32, i32, i32) {
    %c0_i32 = arith.constant 0 : i32
    %c0_i32_0 = arith.constant 0 : i32
    %c0_i32_1 = arith.constant 0 : i32
    return %arg0, %c0_i32, %c0_i32_0 : i32, i32, i32
  }
  func.func @transform_2(%arg0: i32, %arg1: i32, %arg2: i32) -> (i32, i32, i32) {
    %c3_i32 = arith.constant 3 : i32
    %0 = arith.muli %arg1, %c3_i32 : i32
    %1 = arith.addi %0, %arg2 : i32
    %c0_i32 = arith.constant 0 : i32
    %c0_i32_0 = arith.constant 0 : i32
    return %arg0, %c0_i32, %1 : i32, i32, i32
  }
  func.func @transform_3(%arg0: i32, %arg1: i32, %arg2: i32) -> (i32, i32, i32) {
    %c0_i32 = arith.constant 0 : i32
    %c0_i32_0 = arith.constant 0 : i32
    return %arg0, %arg1, %c0_i32 : i32, i32, i32
  }
}

</mosaic_0001>

<llo_original>
// kernel: tpu_custom_call.1
$region0: #{tpu_custom_call.1}
  #allocation0 [shape = 'u32[]', space=smem, size = 0x4, offset = 0x4, fixed_abs, tag = 'smem constant byte address 0x4 - core index']
  #allocation1 [shape = 'u32[144,128]{1,0:T(1,128)}', space=vmem, size = 0x12000, scoped, tag = 'internal scratch']
  #allocation2 [shape = 'f32[128,128]{1,0:T(8,128)}', space=vmem, size = 0x10000, scoped, tag = 'scratch operand']
  %s0 = inlined_call_operand.vmem [shape: f32[2,384,3], index: 0, kind: input, shape index: {}]
  %s1 = inlined_call_operand.vmem [shape: f32[2,3,512], index: 1, kind: input, shape index: {}]
  %s2 = inlined_call_operand.hbm [shape: f32[2,1,384], index: 2, kind: output, shape index: {0}]
  %s3 = inlined_call_operand.hbm [shape: f32[2,1,512], index: 3, kind: output, shape index: {1}]
  %4 = xla_tuple %s2, %s3
  %s5 = sld [smem:[#allocation0]]
  $region53: #{tpu_custom_call.1} parent=0
    _
  %s7 = ssub.s32 1, %s5
  %s8 = scalar_select 0, %s7, %s5
  $region1: #{tpu_custom_call.1} parent=0
    #allocation3 [shape = 'u8[1024]{0}', space=vmem, size = 0x400, scoped, tag = 'output window, operand 0']
    #allocation4 [shape = 's32[2]{0}', space=sflag, size = 0x8, scoped, tag = 'scoped memory for tpu_custom_call.1']
    #allocation5 [shape = 'u8[4096]{0}', space=vmem, size = 0x1000, scoped, tag = 'output window, operand 1']
    #allocation6 [shape = 's32[2]{0}', space=sflag, size = 0x8, scoped, tag = 'scoped memory for tpu_custom_call.1']
    %9 = vsyncpa [#allocation4], 0
    %s10 = scalar_lea.sflag [#allocation4], 1
    %11 = vsyncpa %s10, 0
    %12 = vsyncpa [#allocation6], 0
    %s13 = scalar_lea.sflag [#allocation6], 1
    %14 = vsyncpa %s13, 0
    loop: start=0, step=1, limit=8
    $region2: #{tpu_custom_call.1} parent=1 // loop_pre_header
      _
    $region3: #{tpu_custom_call.1} parent=1 // loop_header
      %s16 = sphi 0, %s20
      %p17 = scmp.ge.s32.totalorder %s16, 8
      %s23 = sphi 0, %s42
      %s24 = sphi 0, %s38
      %s25 = sphi 0, %s34
      %s26 = sphi 0, %s23
      %s27 = sphi 0, %s24
      %s28 = sphi 0, %s25
      %s29 = sphi 0, %s26
      %s30 = sphi 0, %s27
      %s31 = sphi 0, %s28
      %s51 = sphi 0, %s53
      %s54 = sphi 0, %s51
      %s55 = sphi 0, %s54
      %s71 = sphi 0, %s55
      %s77 = sphi 0, %s79
      %s80 = sphi 0, %s77
      %s81 = sphi 0, %s80
      %s97 = sphi 0, %s81
      %s109 = sphi 0, %s111
      %s112 = sphi 0, %s109
      %s113 = sphi 0, %s112
      %s129 = sphi 0, %s113
      %s137 = sphi 0, %s139
      %s140 = sphi 0, %s137
      %s141 = sphi 0, %s140
      %s157 = sphi 0, %s141
    $region4: #{tpu_custom_call.1} parent=1 // loop_header_branch
      %19 = sbr.rel (%p17) target = $region8
    $region5: #{tpu_custom_call.1} parent=1 // loop_body
      %s21 = ssub.s32 %s16, 1
      %s22 = ssub.s32 %s16, 2
      %s32 = sadd.s32 1, %s25
      %p33 = scmp.ge.s32.totalorder %s32, 3
      %s34 = scalar_select %p33, 0, %s32
      %s35 = sadd.s32 1, %s24
      %s36 = scalar_select %p33, %s35, %s24
      %p37 = scmp.ge.s32.totalorder %s36, 1
      %s38 = scalar_select %p37, 0, %s36
      %s39 = sadd.s32 1, %s23
      %s40 = scalar_select %p37, %s39, %s23
      %p41 = scmp.ge.s32.totalorder %s40, 2
      %s42 = scalar_select %p41, 0, %s40
      %s43 = smul.u32 %s24, 3
      %s44 = sadd.s32 %s43, %s25
      %s45 = smul.u32 %s38, 3
      %s46 = sadd.s32 %s45, %s34
      %s47 = ssub.s32 %s23, %s42
      %s48 = ssub.s32 %s44, %s46
      %s49 = sor.u32 %s47, %s48
      %p50 = scmp.eq.s32.totalorder %s49, 0
      %s52 = sadd.s32 %s51, 1
      %s53 = scalar_select %p50, %s51, %s52
      %p56 = pneg %p50
      %p57 = scmp.eq.s32.totalorder %s16, 5
      %p58 = por %p56, %p57
      %p59 = scmp.ne.s32.totalorder %s51, %s54
      %p60 = scmp.eq.s32.totalorder %s16, 0
      %p61 = por %p59, %p60
      %p62 = scmp.ne.s32.totalorder %s51, %s54
      %p63 = scmp.eq.s32.totalorder %s21, 5
      %p64 = por %p62, %p63
      %p65 = scmp.ne.s32.totalorder %s54, %s55
      %p66 = scmp.eq.s32.totalorder %s21, 0
      %p67 = por %p65, %p66
      %p68 = scmp.ne.s32.totalorder %s54, %s55
      %p69 = scmp.eq.s32.totalorder %s22, 5
      %p70 = por %p68, %p69
      %p72 = scmp.ne.s32.totalorder %s55, %s71
      %p73 = scmp.eq.s32.totalorder %s22, 0
      %p74 = por %p72, %p73
      %s75 = ssub.s32 %s23, %s42
      %p76 = scmp.eq.s32.totalorder %s75, 0
      %s78 = sadd.s32 %s77, 1
      %s79 = scalar_select %p76, %s77, %s78
      %p82 = pneg %p76
      %p83 = scmp.eq.s32.totalorder %s16, 5
      %p84 = por %p82, %p83
      %p85 = scmp.ne.s32.totalorder %s77, %s80
      %p86 = scmp.eq.s32.totalorder %s16, 0
      %p87 = por %p85, %p86
      %p88 = scmp.ne.s32.totalorder %s77, %s80
      %p89 = scmp.eq.s32.totalorder %s21, 5
      %p90 = por %p88, %p89
      %p91 = scmp.ne.s32.totalorder %s80, %s81
      %p92 = scmp.eq.s32.totalorder %s21, 0
      %p93 = por %p91, %p92
      %p94 = scmp.ne.s32.totalorder %s80, %s81
      %p95 = scmp.eq.s32.totalorder %s22, 5
      %p96 = por %p94, %p95
      %p98 = scmp.ne.s32.totalorder %s81, %s97
      %p99 = scmp.eq.s32.totalorder %s22, 0
      %p100 = por %p98, %p99
      %s101 = smul.u32 %s24, 3
      %s102 = sadd.s32 %s101, %s25
      %s103 = smul.u32 %s38, 3
      %s104 = sadd.s32 %s103, %s34
      %s105 = ssub.s32 %s23, %s42
      %s106 = ssub.s32 %s102, %s104
      %s107 = sor.u32 %s105, %s106
      %p108 = scmp.eq.s32.totalorder %s107, 0
      %s110 = sadd.s32 %s109, 1
      %s111 = scalar_select %p108, %s109, %s110
      %p114 = pneg %p108
      %p115 = scmp.eq.s32.totalorder %s16, 5
      %p116 = por %p114, %p115
      %p117 = scmp.ne.s32.totalorder %s109, %s112
      %p118 = scmp.eq.s32.totalorder %s16, 0
      %p119 = por %p117, %p118
      %p120 = scmp.ne.s32.totalorder %s109, %s112
      %p121 = scmp.eq.s32.totalorder %s21, 5
      %p122 = por %p120, %p121
      %p123 = scmp.ne.s32.totalorder %s112, %s113
      %p124 = scmp.eq.s32.totalorder %s21, 0
      %p125 = por %p123, %p124
      %p126 = scmp.ne.s32.totalorder %s112, %s113
      %p127 = scmp.eq.s32.totalorder %s22, 5
      %p128 = por %p126, %p127
      %p130 = scmp.ne.s32.totalorder %s113, %s129
      %p131 = scmp.eq.s32.totalorder %s22, 0
      %p132 = por %p130, %p131
      %s133 = ssub.s32 %s23, %s42
      %s134 = ssub.s32 %s24, %s38
      %s135 = sor.u32 %s133, %s134
      %p136 = scmp.eq.s32.totalorder %s135, 0
      %s138 = sadd.s32 %s137, 1
      %s139 = scalar_select %p136, %s137, %s138
      %p142 = pneg %p136
      %p143 = scmp.eq.s32.totalorder %s16, 5
      %p144 = por %p142, %p143
      %p145 = scmp.ne.s32.totalorder %s137, %s140
      %p146 = scmp.eq.s32.totalorder %s16, 0
      %p147 = por %p145, %p146
      %p148 = scmp.ne.s32.totalorder %s137, %s140
      %p149 = scmp.eq.s32.totalorder %s21, 5
      %p150 = por %p148, %p149
      %p151 = scmp.ne.s32.totalorder %s140, %s141
      %p152 = scmp.eq.s32.totalorder %s21, 0
      %p153 = por %p151, %p152
      %p154 = scmp.ne.s32.totalorder %s140, %s141
      %p155 = scmp.eq.s32.totalorder %s22, 5
      %p156 = por %p154, %p155
      %p158 = scmp.ne.s32.totalorder %s141, %s157
      %p159 = scmp.eq.s32.totalorder %s22, 0
      %p160 = por %p158, %p159
      %p161 = scmp.le.s32.totalorder 1, %s16
      %p162 = scmp.lt.s32.totalorder %s16, 7
      %p163 = pnand %p161, %p162
      %p164 = pneg %p163
      // Predicated region
      $region9: #{tpu_custom_call.1} parent=5 // pred_check
        _
      $region10: #{tpu_custom_call.1} parent=5 // pred_check_branch
        %166 = sbr.rel (%p163) target = $region12
      $region11: #{tpu_custom_call.1} parent=5 // pred_region
        %s167 = ssub.s32 %s16, 1
      $region12: #{tpu_custom_call.1} parent=5 // pred_fallthru
        _
      %p168 = scmp.lt.s32.totalorder %s16, 6
      // Predicated region
      $region13: #{tpu_custom_call.1} parent=5 // pred_check
        %p169 = pneg %p168
      $region14: #{tpu_custom_call.1} parent=5 // pred_check_branch
        %171 = sbr.rel (%p169) target = $region16
      $region15: #{tpu_custom_call.1} parent=5 // pred_region
        // Predicated region
        $region17: #{tpu_custom_call.1} parent=15 // pred_check
          %p172 = pneg %p61
        $region18: #{tpu_custom_call.1} parent=15 // pred_check_branch
          %174 = sbr.rel (%p172) target = $region20
        $region19: #{tpu_custom_call.1} parent=15 // pred_region
          %s175 = smul.u32 %s24, 3
          %s176 = sadd.s32 %s175, %s25
          %s177 = smul.u32 16, %s176
          %p178 = scmp.lt.s32.totalorder %s23, 1
          %s179 = scalar_select %p178, %s23, 1
          %p180 = scmp.lt.s32.totalorder %s177, 47
          %s181 = scalar_select %p180, %s177, 47
          %s182 = smul.addr %s179, 48
          %s183 = sadd.s32 %s181, %s182
          %s184 = smul.addr %s183, 8
          %s185 = scalar_lea.vmem %s0, %s184
          %s186 = smul.u32 %s24, 3
          %s187 = sadd.s32 %s186, %s25
          %s188 = smul.u32 16, %s187
        $region20: #{tpu_custom_call.1} parent=15 // pred_fallthru
          _
        // Predicated region
        $region21: #{tpu_custom_call.1} parent=15 // pred_check
          %p189 = pneg %p87
        $region22: #{tpu_custom_call.1} parent=15 // pred_check_branch
          %191 = sbr.rel (%p189) target = $region24
        $region23: #{tpu_custom_call.1} parent=15 // pred_region
          %p192 = scmp.lt.s32.totalorder %s23, 1
          %s193 = scalar_select %p192, %s23, 1
          %s194 = smul.addr %s193, 4
          %s195 = smul.addr %s194, 4
          %s196 = scalar_lea.vmem %s1, %s195
        $region24: #{tpu_custom_call.1} parent=15 // pred_fallthru
          _
      $region16: #{tpu_custom_call.1} parent=5 // pred_fallthru
        _
      %p197 = scmp.le.s32.totalorder 1, %s16
      %p198 = scmp.lt.s32.totalorder %s16, 7
      %p199 = pnand %p197, %p198
      %p200 = pneg %p199
      // Predicated region
      $region25: #{tpu_custom_call.1} parent=5 // pred_check
        _
      $region26: #{tpu_custom_call.1} parent=5 // pred_check_branch
        %202 = sbr.rel (%p199) target = $region28
      $region27: #{tpu_custom_call.1} parent=5 // pred_region
        %s203 = ssub.s32 %s16, 1
        %s204 = smul.u32 %s27, 3
        %s205 = sadd.s32 %s204, %s28
        %s206 = smul.u32 16, %s205
        %p207 = scmp.lt.s32.totalorder %s26, 1
        %s208 = scalar_select %p207, %s26, 1
        %p209 = scmp.lt.s32.totalorder %s206, 47
        %s210 = scalar_select %p209, %s206, 47
        %s211 = smul.addr %s208, 48
        %s212 = sadd.s32 %s210, %s211
        %s213 = smul.addr %s212, 8
        %s214 = scalar_lea.vmem %s0, %s213
        %p215 = pneg %p67
        %p216 = pneg %p64
        %p217 = scmp.lt.s32.totalorder %s26, 1
        %s218 = scalar_select %p217, %s26, 1
        %s219 = smul.addr %s218, 4
        %s220 = smul.addr %s219, 4
        %s221 = scalar_lea.vmem %s1, %s220
        %p222 = pneg %p93
        %p223 = pneg %p90
        %p224 = pneg %p125
        %p225 = pneg %p122
        %s226 = sand.u32 %s112, 1
        %s227 = scalar_lea.sflag [#allocation4], %s226
        %s228 = sand.u32 %s112, 1
        %s229 = scalar_lea.vmem [#allocation3], %s228
        %p230 = pneg %p153
        %p231 = pneg %p150
        %s232 = sand.u32 %s140, 1
        %s233 = scalar_lea.sflag [#allocation6], %s232
        %s234 = sand.u32 %s140, 1
        %s235 = smul.addr %s234, 4
        %s236 = scalar_lea.vmem [#allocation5], %s235
        %s237 = smul.u32 %s27, 3
        %s238 = sadd.s32 %s237, %s28
        %s239 = smul.u32 16, %s238
        %p240 = scmp.lt.s32.totalorder %s26, 1
        %s241 = scalar_select %p240, %s26, 1
        %p242 = scmp.lt.s32.totalorder %s239, 47
        %s243 = scalar_select %p242, %s239, 47
        %s244 = smul.addr %s241, 48
        %s245 = sadd.s32 %s243, %s244
        %s246 = smul.addr %s245, 8
        %s247 = scalar_lea.vmem %s0, %s246
        %s248 = smul.u32 %s27, 3
        %s249 = sadd.s32 %s248, %s28
        %s250 = smul.u32 16, %s249
        %p251 = scmp.lt.s32.totalorder %s26, 1
        %s252 = scalar_select %p251, %s26, 1
        %s253 = smul.addr %s252, 4
        %s254 = smul.addr %s253, 4
        %s255 = scalar_lea.vmem %s1, %s254
        %s256 = smul.u32 %s27, 3
        %s257 = sadd.s32 %s256, %s28
        %p258 = scmp.eq.s32.totalorder %s28, 0
        // Predicated region
        $region29: #{tpu_custom_call.1} parent=27 // pred_check
          %p259 = pneg %p258
        $region30: #{tpu_custom_call.1} parent=27 // pred_check_branch
          %261 = sbr.rel (%p259) target = $region32
        $region31: #{tpu_custom_call.1} parent=27 // pred_region
          %v262 = vlaneseq
          %vm263 = vcmp.ge.s32.totalorder %v262, 0
          %vm264 = vcmp.lt.s32.totalorder %v262, 512
          %vm265 = vmand %vm263, %vm264
          %266 = vst.msk [vmem:[%s236] sm:$0xf] %vm265, inf
        $region32: #{tpu_custom_call.1} parent=27 // pred_fallthru
          _
        %v267 = vld [vmem:[%s247] sm:$0xff]
        %v268 = vld [vmem:[%s247 + $0x8] sm:$0xff]
        %v269 = vld [vmem:[%s247 + $0x10] sm:$0xff]
        %v270 = vld [vmem:[%s247 + $0x18] sm:$0xff]
        %v271 = vld [vmem:[%s247 + $0x20] sm:$0xff]
        %v272 = vld [vmem:[%s247 + $0x28] sm:$0xff]
        %v273 = vld [vmem:[%s247 + $0x30] sm:$0xff]
        %v274 = vld [vmem:[%s247 + $0x38] sm:$0xff]
        %v275 = vld [vmem:[%s247 + $0x40] sm:$0xff]
        %v276 = vld [vmem:[%s247 + $0x48] sm:$0xff]
        %v277 = vld [vmem:[%s247 + $0x50] sm:$0xff]
        %v278 = vld [vmem:[%s247 + $0x58] sm:$0xff]
        %v279 = vld [vmem:[%s247 + $0x60] sm:$0xff]
        %v280 = vld [vmem:[%s247 + $0x68] sm:$0xff]
        %v281 = vld [vmem:[%s247 + $0x70] sm:$0xff]
        %v282 = vld [vmem:[%s247 + $0x78] sm:$0xff]
        %283 = vst [vmem:[#allocation2] sm:$0xff] inf
        %284 = vst [vmem:[#allocation2 + $0x8] sm:$0xff] inf
        %285 = vst [vmem:[#allocation2 + $0x10] sm:$0xff] inf
        %286 = vst [vmem:[#allocation2 + $0x18] sm:$0xff] inf
        %287 = vst [vmem:[#allocation2 + $0x20] sm:$0xff] inf
        %288 = vst [vmem:[#allocation2 + $0x28] sm:$0xff] inf
        %289 = vst [vmem:[#allocation2 + $0x30] sm:$0xff] inf
        %290 = vst [vmem:[#allocation2 + $0x38] sm:$0xff] inf
        %291 = vst [vmem:[#allocation2 + $0x40] sm:$0xff] inf
        %292 = vst [vmem:[#allocation2 + $0x48] sm:$0xff] inf
        %293 = vst [vmem:[#allocation2 + $0x50] sm:$0xff] inf
        %294 = vst [vmem:[#allocation2 + $0x58] sm:$0xff] inf
        %295 = vst [vmem:[#allocation2 + $0x60] sm:$0xff] inf
        %296 = vst [vmem:[#allocation2 + $0x68] sm:$0xff] inf
        %297 = vst [vmem:[#allocation2 + $0x70] sm:$0xff] inf
        %298 = vst [vmem:[#allocation2 + $0x78] sm:$0xff] inf
        %v299 = vld [vmem:[%s255] sm:$0x77]
        %301 = vset.pattern.permute.xlu0 0
        %302 = vperm.xlu0 %301, %v267
        %v303 = vpop.permute.xlu0 %302
        %306 = vset.pattern.permute.xlu0 0
        %307 = vperm.xlu0 %306, %v268
        %v308 = vpop.permute.xlu0 %307
        %311 = vset.pattern.permute.xlu0 0
        %312 = vperm.xlu0 %311, %v269
        %v313 = vpop.permute.xlu0 %312
        %316 = vset.pattern.permute.xlu0 0
        %317 = vperm.xlu0 %316, %v270
        %v318 = vpop.permute.xlu0 %317
        %321 = vset.pattern.permute.xlu0 0
        %322 = vperm.xlu0 %321, %v271
        %v323 = vpop.permute.xlu0 %322
        %326 = vset.pattern.permute.xlu0 0
        %327 = vperm.xlu0 %326, %v272
        %v328 = vpop.permute.xlu0 %327
        %331 = vset.pattern.permute.xlu0 0
        %332 = vperm.xlu0 %331, %v273
        %v333 = vpop.permute.xlu0 %332
        %336 = vset.pattern.permute.xlu0 0
        %337 = vperm.xlu0 %336, %v274
        %v338 = vpop.permute.xlu0 %337
        %341 = vset.pattern.permute.xlu0 0
        %342 = vperm.xlu0 %341, %v275
        %v343 = vpop.permute.xlu0 %342
        %346 = vset.pattern.permute.xlu0 0
        %347 = vperm.xlu0 %346, %v276
        %v348 = vpop.permute.xlu0 %347
        %351 = vset.pattern.permute.xlu0 0
        %352 = vperm.xlu0 %351, %v277
        %v353 = vpop.permute.xlu0 %352
        %356 = vset.pattern.permute.xlu0 0
        %357 = vperm.xlu0 %356, %v278
        %v358 = vpop.permute.xlu0 %357
        %361 = vset.pattern.permute.xlu0 0
        %362 = vperm.xlu0 %361, %v279
        %v363 = vpop.permute.xlu0 %362
        %366 = vset.pattern.permute.xlu0 0
        %367 = vperm.xlu0 %366, %v280
        %v368 = vpop.permute.xlu0 %367
        %371 = vset.pattern.permute.xlu0 0
        %372 = vperm.xlu0 %371, %v281
        %v373 = vpop.permute.xlu0 %372
        %376 = vset.pattern.permute.xlu0 0
        %377 = vperm.xlu0 %376, %v282
        %v378 = vpop.permute.xlu0 %377
        %v381 = vlaneseq
        %v382 = vshrl.u32 %v381, 7
        %v383 = vsub.s32 0, %v382
        %v384 = vrot.slane %v299, %v383
        %v385 = vlaneseq
        %v386 = vshrl.u32 %v385, 7
        %v387 = vsub.s32 4, %v386
        %v388 = vrot.slane %v299, %v387
        %v391 = vlaneseq
        %v392 = vshrl.u32 %v391, 7
        %v393 = vsub.s32 0, %v392
        %v394 = vrot.slane %v384, %v393
        %v395 = vlaneseq
        %v396 = vshrl.u32 %v395, 7
        %v397 = vsub.s32 0, %v396
        %v398 = vrot.slane %v388, %v397
        %v399 = vsub.f32 %v303, %v394
        %v400 = vsub.f32 %v303, %v398
        %v401 = vsub.f32 %v308, %v394
        %v402 = vsub.f32 %v308, %v398
        %v403 = vsub.f32 %v313, %v394
        %v404 = vsub.f32 %v313, %v398
        %v405 = vsub.f32 %v318, %v394
        %v406 = vsub.f32 %v318, %v398
        %v407 = vsub.f32 %v323, %v394
        %v408 = vsub.f32 %v323, %v398
        %v409 = vsub.f32 %v328, %v394
        %v410 = vsub.f32 %v328, %v398
        %v411 = vsub.f32 %v333, %v394
        %v412 = vsub.f32 %v333, %v398
        %v413 = vsub.f32 %v338, %v394
        %v414 = vsub.f32 %v338, %v398
        %v415 = vsub.f32 %v343, %v394
        %v416 = vsub.f32 %v343, %v398
        %v417 = vsub.f32 %v348, %v394
        %v418 = vsub.f32 %v348, %v398
        %v419 = vsub.f32 %v353, %v394
        %v420 = vsub.f32 %v353, %v398
        %v421 = vsub.f32 %v358, %v394
        %v422 = vsub.f32 %v358, %v398
        %v423 = vsub.f32 %v363, %v394
        %v424 = vsub.f32 %v363, %v398
        %v425 = vsub.f32 %v368, %v394
        %v426 = vsub.f32 %v368, %v398
        %v427 = vsub.f32 %v373, %v394
        %v428 = vsub.f32 %v373, %v398
        %v429 = vsub.f32 %v378, %v394
        %v430 = vsub.f32 %v378, %v398
        %v431 = vmul.f32 %v399, %v399
        %v432 = vmul.f32 %v400, %v400
        %v433 = vmul.f32 %v401, %v401
        %v434 = vmul.f32 %v402, %v402
        %v435 = vmul.f32 %v403, %v403
        %v436 = vmul.f32 %v404, %v404
        %v437 = vmul.f32 %v405, %v405
        %v438 = vmul.f32 %v406, %v406
        %v439 = vmul.f32 %v407, %v407
        %v440 = vmul.f32 %v408, %v408
        %v441 = vmul.f32 %v409, %v409
        %v442 = vmul.f32 %v410, %v410
        %v443 = vmul.f32 %v411, %v411
        %v444 = vmul.f32 %v412, %v412
        %v445 = vmul.f32 %v413, %v413
        %v446 = vmul.f32 %v414, %v414
        %v447 = vmul.f32 %v415, %v415
        %v448 = vmul.f32 %v416, %v416
        %v449 = vmul.f32 %v417, %v417
        %v450 = vmul.f32 %v418, %v418
        %v451 = vmul.f32 %v419, %v419
        %v452 = vmul.f32 %v420, %v420
        %v453 = vmul.f32 %v421, %v421
        %v454 = vmul.f32 %v422, %v422
        %v455 = vmul.f32 %v423, %v423
        %v456 = vmul.f32 %v424, %v424
        %v457 = vmul.f32 %v425, %v425
        %v458 = vmul.f32 %v426, %v426
        %v459 = vmul.f32 %v427, %v427
        %v460 = vmul.f32 %v428, %v428
        %v461 = vmul.f32 %v429, %v429
        %v462 = vmul.f32 %v430, %v430
        %463 = vset.pattern.permute.xlu0 1
        %464 = vperm.xlu0 %463, %v267
        %v465 = vpop.permute.xlu0 %464
        %467 = vset.pattern.permute.xlu0 1
        %468 = vperm.xlu0 %467, %v268
        %v469 = vpop.permute.xlu0 %468
        %471 = vset.pattern.permute.xlu0 1
        %472 = vperm.xlu0 %471, %v269
        %v473 = vpop.permute.xlu0 %472
        %475 = vset.pattern.permute.xlu0 1
        %476 = vperm.xlu0 %475, %v270
        %v477 = vpop.permute.xlu0 %476
        %479 = vset.pattern.permute.xlu0 1
        %480 = vperm.xlu0 %479, %v271
        %v481 = vpop.permute.xlu0 %480
        %483 = vset.pattern.permute.xlu0 1
        %484 = vperm.xlu0 %483, %v272
        %v485 = vpop.permute.xlu0 %484
        %487 = vset.pattern.permute.xlu0 1
        %488 = vperm.xlu0 %487, %v273
        %v489 = vpop.permute.xlu0 %488
        %491 = vset.pattern.permute.xlu0 1
        %492 = vperm.xlu0 %491, %v274
        %v493 = vpop.permute.xlu0 %492
        %495 = vset.pattern.permute.xlu0 1
        %496 = vperm.xlu0 %495, %v275
        %v497 = vpop.permute.xlu0 %496
        %499 = vset.pattern.permute.xlu0 1
        %500 = vperm.xlu0 %499, %v276
        %v501 = vpop.permute.xlu0 %500
        %503 = vset.pattern.permute.xlu0 1
        %504 = vperm.xlu0 %503, %v277
        %v505 = vpop.permute.xlu0 %504
        %507 = vset.pattern.permute.xlu0 1
        %508 = vperm.xlu0 %507, %v278
        %v509 = vpop.permute.xlu0 %508
        %511 = vset.pattern.permute.xlu0 1
        %512 = vperm.xlu0 %511, %v279
        %v513 = vpop.permute.xlu0 %512
        %515 = vset.pattern.permute.xlu0 1
        %516 = vperm.xlu0 %515, %v280
        %v517 = vpop.permute.xlu0 %516
        %519 = vset.pattern.permute.xlu0 1
        %520 = vperm.xlu0 %519, %v281
        %v521 = vpop.permute.xlu0 %520
        %523 = vset.pattern.permute.xlu0 1
        %524 = vperm.xlu0 %523, %v282
        %v525 = vpop.permute.xlu0 %524
        %v527 = vlaneseq
        %v528 = vshrl.u32 %v527, 7
        %v529 = vsub.s32 1, %v528
        %v530 = vrot.slane %v299, %v529
        %v531 = vlaneseq
        %v532 = vshrl.u32 %v531, 7
        %v533 = vsub.s32 5, %v532
        %v534 = vrot.slane %v299, %v533
        %v537 = vlaneseq
        %v538 = vshrl.u32 %v537, 7
        %v539 = vsub.s32 1, %v538
        %v540 = vrot.slane %v530, %v539
        %v541 = vlaneseq
        %v542 = vshrl.u32 %v541, 7
        %v543 = vsub.s32 1, %v542
        %v544 = vrot.slane %v534, %v543
        %v545 = vsub.f32 %v465, %v540
        %v546 = vsub.f32 %v465, %v544
        %v547 = vsub.f32 %v469, %v540
        %v548 = vsub.f32 %v469, %v544
        %v549 = vsub.f32 %v473, %v540
        %v550 = vsub.f32 %v473, %v544
        %v551 = vsub.f32 %v477, %v540
        %v552 = vsub.f32 %v477, %v544
        %v553 = vsub.f32 %v481, %v540
        %v554 = vsub.f32 %v481, %v544
        %v555 = vsub.f32 %v485, %v540
        %v556 = vsub.f32 %v485, %v544
        %v557 = vsub.f32 %v489, %v540
        %v558 = vsub.f32 %v489, %v544
        %v559 = vsub.f32 %v493, %v540
        %v560 = vsub.f32 %v493, %v544
        %v561 = vsub.f32 %v497, %v540
        %v562 = vsub.f32 %v497, %v544
        %v563 = vsub.f32 %v501, %v540
        %v564 = vsub.f32 %v501, %v544
        %v565 = vsub.f32 %v505, %v540
        %v566 = vsub.f32 %v505, %v544
        %v567 = vsub.f32 %v509, %v540
        %v568 = vsub.f32 %v509, %v544
        %v569 = vsub.f32 %v513, %v540
        %v570 = vsub.f32 %v513, %v544
        %v571 = vsub.f32 %v517, %v540
        %v572 = vsub.f32 %v517, %v544
        %v573 = vsub.f32 %v521, %v540
        %v574 = vsub.f32 %v521, %v544
        %v575 = vsub.f32 %v525, %v540
        %v576 = vsub.f32 %v525, %v544
        %v577 = vmul.f32 %v545, %v545
        %v578 = vmul.f32 %v546, %v546
        %v579 = vmul.f32 %v547, %v547
        %v580 = vmul.f32 %v548, %v548
        %v581 = vmul.f32 %v549, %v549
        %v582 = vmul.f32 %v550, %v550
        %v583 = vmul.f32 %v551, %v551
        %v584 = vmul.f32 %v552, %v552
        %v585 = vmul.f32 %v553, %v553
        %v586 = vmul.f32 %v554, %v554
        %v587 = vmul.f32 %v555, %v555
        %v588 = vmul.f32 %v556, %v556
        %v589 = vmul.f32 %v557, %v557
        %v590 = vmul.f32 %v558, %v558
        %v591 = vmul.f32 %v559, %v559
        %v592 = vmul.f32 %v560, %v560
        %v593 = vmul.f32 %v561, %v561
        %v594 = vmul.f32 %v562, %v562
        %v595 = vmul.f32 %v563, %v563
        %v596 = vmul.f32 %v564, %v564
        %v597 = vmul.f32 %v565, %v565
        %v598 = vmul.f32 %v566, %v566
        %v599 = vmul.f32 %v567, %v567
        %v600 = vmul.f32 %v568, %v568
        %v601 = vmul.f32 %v569, %v569
        %v602 = vmul.f32 %v570, %v570
        %v603 = vmul.f32 %v571, %v571
        %v604 = vmul.f32 %v572, %v572
        %v605 = vmul.f32 %v573, %v573
        %v606 = vmul.f32 %v574, %v574
        %v607 = vmul.f32 %v575, %v575
        %v608 = vmul.f32 %v576, %v576
        %v609 = vadd.f32 %v431, %v577
        %v610 = vadd.f32 %v432, %v578
        %v611 = vadd.f32 %v433, %v579
        %v612 = vadd.f32 %v434, %v580
        %v613 = vadd.f32 %v435, %v581
        %v614 = vadd.f32 %v436, %v582
        %v615 = vadd.f32 %v437, %v583
        %v616 = vadd.f32 %v438, %v584
        %v617 = vadd.f32 %v439, %v585
        %v618 = vadd.f32 %v440, %v586
        %v619 = vadd.f32 %v441, %v587
        %v620 = vadd.f32 %v442, %v588
        %v621 = vadd.f32 %v443, %v589
        %v622 = vadd.f32 %v444, %v590
        %v623 = vadd.f32 %v445, %v591
        %v624 = vadd.f32 %v446, %v592
        %v625 = vadd.f32 %v447, %v593
        %v626 = vadd.f32 %v448, %v594
        %v627 = vadd.f32 %v449, %v595
        %v628 = vadd.f32 %v450, %v596
        %v629 = vadd.f32 %v451, %v597
        %v630 = vadd.f32 %v452, %v598
        %v631 = vadd.f32 %v453, %v599
        %v632 = vadd.f32 %v454, %v600
        %v633 = vadd.f32 %v455, %v601
        %v634 = vadd.f32 %v456, %v602
        %v635 = vadd.f32 %v457, %v603
        %v636 = vadd.f32 %v458, %v604
        %v637 = vadd.f32 %v459, %v605
        %v638 = vadd.f32 %v460, %v606
        %v639 = vadd.f32 %v461, %v607
        %v640 = vadd.f32 %v462, %v608
        %641 = vset.pattern.permute.xlu0 2
        %642 = vperm.xlu0 %641, %v267
        %v643 = vpop.permute.xlu0 %642
        %645 = vset.pattern.permute.xlu0 2
        %646 = vperm.xlu0 %645, %v268
        %v647 = vpop.permute.xlu0 %646
        %649 = vset.pattern.permute.xlu0 2
        %650 = vperm.xlu0 %649, %v269
        %v651 = vpop.permute.xlu0 %650
        %653 = vset.pattern.permute.xlu0 2
        %654 = vperm.xlu0 %653, %v270
        %v655 = vpop.permute.xlu0 %654
        %657 = vset.pattern.permute.xlu0 2
        %658 = vperm.xlu0 %657, %v271
        %v659 = vpop.permute.xlu0 %658
        %661 = vset.pattern.permute.xlu0 2
        %662 = vperm.xlu0 %661, %v272
        %v663 = vpop.permute.xlu0 %662
        %665 = vset.pattern.permute.xlu0 2
        %666 = vperm.xlu0 %665, %v273
        %v667 = vpop.permute.xlu0 %666
        %669 = vset.pattern.permute.xlu0 2
        %670 = vperm.xlu0 %669, %v274
        %v671 = vpop.permute.xlu0 %670
        %673 = vset.pattern.permute.xlu0 2
        %674 = vperm.xlu0 %673, %v275
        %v675 = vpop.permute.xlu0 %674
        %677 = vset.pattern.permute.xlu0 2
        %678 = vperm.xlu0 %677, %v276
        %v679 = vpop.permute.xlu0 %678
        %681 = vset.pattern.permute.xlu0 2
        %682 = vperm.xlu0 %681, %v277
        %v683 = vpop.permute.xlu0 %682
        %685 = vset.pattern.permute.xlu0 2
        %686 = vperm.xlu0 %685, %v278
        %v687 = vpop.permute.xlu0 %686
        %689 = vset.pattern.permute.xlu0 2
        %690 = vperm.xlu0 %689, %v279
        %v691 = vpop.permute.xlu0 %690
        %693 = vset.pattern.permute.xlu0 2
        %694 = vperm.xlu0 %693, %v280
        %v695 = vpop.permute.xlu0 %694
        %697 = vset.pattern.permute.xlu0 2
        %698 = vperm.xlu0 %697, %v281
        %v699 = vpop.permute.xlu0 %698
        %701 = vset.pattern.permute.xlu0 2
        %702 = vperm.xlu0 %701, %v282
        %v703 = vpop.permute.xlu0 %702
        %v705 = vlaneseq
        %v706 = vshrl.u32 %v705, 7
        %v707 = vsub.s32 2, %v706
        %v708 = vrot.slane %v299, %v707
        %v709 = vlaneseq
        %v710 = vshrl.u32 %v709, 7
        %v711 = vsub.s32 6, %v710
        %v712 = vrot.slane %v299, %v711
        %v715 = vlaneseq
        %v716 = vshrl.u32 %v715, 7
        %v717 = vsub.s32 2, %v716
        %v718 = vrot.slane %v708, %v717
        %v719 = vlaneseq
        %v720 = vshrl.u32 %v719, 7
        %v721 = vsub.s32 2, %v720
        %v722 = vrot.slane %v712, %v721
        %v723 = vsub.f32 %v643, %v718
        %v724 = vsub.f32 %v643, %v722
        %v725 = vsub.f32 %v647, %v718
        %v726 = vsub.f32 %v647, %v722
        %v727 = vsub.f32 %v651, %v718
        %v728 = vsub.f32 %v651, %v722
        %v729 = vsub.f32 %v655, %v718
        %v730 = vsub.f32 %v655, %v722
        %v731 = vsub.f32 %v659, %v718
        %v732 = vsub.f32 %v659, %v722
        %v733 = vsub.f32 %v663, %v718
        %v734 = vsub.f32 %v663, %v722
        %v735 = vsub.f32 %v667, %v718
        %v736 = vsub.f32 %v667, %v722
        %v737 = vsub.f32 %v671, %v718
        %v738 = vsub.f32 %v671, %v722
        %v739 = vsub.f32 %v675, %v718
        %v740 = vsub.f32 %v675, %v722
        %v741 = vsub.f32 %v679, %v718
        %v742 = vsub.f32 %v679, %v722
        %v743 = vsub.f32 %v683, %v718
        %v744 = vsub.f32 %v683, %v722
        %v745 = vsub.f32 %v687, %v718
        %v746 = vsub.f32 %v687, %v722
        %v747 = vsub.f32 %v691, %v718
        %v748 = vsub.f32 %v691, %v722
        %v749 = vsub.f32 %v695, %v718
        %v750 = vsub.f32 %v695, %v722
        %v751 = vsub.f32 %v699, %v718
        %v752 = vsub.f32 %v699, %v722
        %v753 = vsub.f32 %v703, %v718
        %v754 = vsub.f32 %v703, %v722
        %v755 = vmul.f32 %v723, %v723
        %v756 = vmul.f32 %v724, %v724
        %v757 = vmul.f32 %v725, %v725
        %v758 = vmul.f32 %v726, %v726
        %v759 = vmul.f32 %v727, %v727
        %v760 = vmul.f32 %v728, %v728
        %v761 = vmul.f32 %v729, %v729
        %v762 = vmul.f32 %v730, %v730
        %v763 = vmul.f32 %v731, %v731
        %v764 = vmul.f32 %v732, %v732
        %v765 = vmul.f32 %v733, %v733
        %v766 = vmul.f32 %v734, %v734
        %v767 = vmul.f32 %v735, %v735
        %v768 = vmul.f32 %v736, %v736
        %v769 = vmul.f32 %v737, %v737
        %v770 = vmul.f32 %v738, %v738
        %v771 = vmul.f32 %v739, %v739
        %v772 = vmul.f32 %v740, %v740
        %v773 = vmul.f32 %v741, %v741
        %v774 = vmul.f32 %v742, %v742
        %v775 = vmul.f32 %v743, %v743
        %v776 = vmul.f32 %v744, %v744
        %v777 = vmul.f32 %v745, %v745
        %v778 = vmul.f32 %v746, %v746
        %v779 = vmul.f32 %v747, %v747
        %v780 = vmul.f32 %v748, %v748
        %v781 = vmul.f32 %v749, %v749
        %v782 = vmul.f32 %v750, %v750
        %v783 = vmul.f32 %v751, %v751
        %v784 = vmul.f32 %v752, %v752
        %v785 = vmul.f32 %v753, %v753
        %v786 = vmul.f32 %v754, %v754
        %v787 = vadd.f32 %v609, %v755
        %v788 = vadd.f32 %v610, %v756
        %v789 = vadd.f32 %v611, %v757
        %v790 = vadd.f32 %v612, %v758
        %v791 = vadd.f32 %v613, %v759
        %v792 = vadd.f32 %v614, %v760
        %v793 = vadd.f32 %v615, %v761
        %v794 = vadd.f32 %v616, %v762
        %v795 = vadd.f32 %v617, %v763
        %v796 = vadd.f32 %v618, %v764
        %v797 = vadd.f32 %v619, %v765
        %v798 = vadd.f32 %v620, %v766
        %v799 = vadd.f32 %v621, %v767
        %v800 = vadd.f32 %v622, %v768
        %v801 = vadd.f32 %v623, %v769
        %v802 = vadd.f32 %v624, %v770
        %v803 = vadd.f32 %v625, %v771
        %v804 = vadd.f32 %v626, %v772
        %v805 = vadd.f32 %v627, %v773
        %v806 = vadd.f32 %v628, %v774
        %v807 = vadd.f32 %v629, %v775
        %v808 = vadd.f32 %v630, %v776
        %v809 = vadd.f32 %v631, %v777
        %v810 = vadd.f32 %v632, %v778
        %v811 = vadd.f32 %v633, %v779
        %v812 = vadd.f32 %v634, %v780
        %v813 = vadd.f32 %v635, %v781
        %v814 = vadd.f32 %v636, %v782
        %v815 = vadd.f32 %v637, %v783
        %v816 = vadd.f32 %v638, %v784
        %v817 = vadd.f32 %v639, %v785
        %v818 = vadd.f32 %v640, %v786
        %v819 = vmin.f32 %v787, %v789
        %v820 = vmin.f32 %v788, %v790
        %v821 = vmin.f32 %v819, %v791
        %v822 = vmin.f32 %v820, %v792
        %v823 = vmin.f32 %v821, %v793
        %v824 = vmin.f32 %v822, %v794
        %v825 = vmin.f32 %v823, %v795
        %v826 = vmin.f32 %v824, %v796
        %v827 = vmin.f32 %v825, %v797
        %v828 = vmin.f32 %v826, %v798
        %v829 = vmin.f32 %v827, %v799
        %v830 = vmin.f32 %v828, %v800
        %v831 = vmin.f32 %v829, %v801
        %v832 = vmin.f32 %v830, %v802
        %v833 = vmin.f32 %v831, %v803
        %v834 = vmin.f32 %v832, %v804
        %v835 = vmin.f32 %v833, %v805
        %v836 = vmin.f32 %v834, %v806
        %v837 = vmin.f32 %v835, %v807
        %v838 = vmin.f32 %v836, %v808
        %v839 = vmin.f32 %v837, %v809
        %v840 = vmin.f32 %v838, %v810
        %v841 = vmin.f32 %v839, %v811
        %v842 = vmin.f32 %v840, %v812
        %v843 = vmin.f32 %v841, %v813
        %v844 = vmin.f32 %v842, %v814
        %v845 = vmin.f32 %v843, %v815
        %v846 = vmin.f32 %v844, %v816
        %v847 = vmin.f32 %v845, %v817
        %v848 = vmin.f32 %v846, %v818
        %v849 = vrot.slane %v847, 4
        %v850 = vmin.f32 %v847, %v849
        %v851 = vrot.slane %v850, 2
        %v852 = vmin.f32 %v850, %v851
        %v853 = vrot.slane %v852, 1
        %v854 = vmin.f32 %v852, %v853
        %v855 = vrot.slane %v848, 4
        %v856 = vmin.f32 %v848, %v855
        %v857 = vrot.slane %v856, 2
        %v858 = vmin.f32 %v856, %v857
        %v859 = vrot.slane %v858, 1
        %v860 = vmin.f32 %v858, %v859
        %v861 = vld [vmem:[%s236] sm:$0x3]
        %v864 = vcombine.low %v854, %v860
        %v866 = vunpack.c.l.s4 1966171168
        %v867 = vunpack.c.0.s8 %v866
        %v868 = vlaneseq
        %v869 = vshrl.u32 %v868, 7
        %v870 = vsub.s32 %v867, %v869
        %v871 = vrot.slane %v864, %v870
        %v873 = vunpack.c.l.s4 1966171168
        %v874 = vunpack.c.0.s8 %v873
        %v875 = vlaneseq
        %v876 = vshrl.u32 %v875, 7
        %v877 = vsub.s32 %v874, %v876
        %v878 = vrot.slane %v871, %v877
        %v880 = vmin.f32 %v861, %v878
        %v881 = vlaneseq
        %vm882 = vcmp.ge.s32.totalorder %v881, 0
        %vm883 = vcmp.lt.s32.totalorder %v881, 256
        %vm884 = vmand %vm882, %vm883
        %885 = vst.msk [vmem:[%s236] sm:$0x3] %vm884, %v880
        %v886 = vmin.f32 %v787, %v788
        %v887 = vmin.f32 %v789, %v790
        %v888 = vmin.f32 %v791, %v792
        %v889 = vmin.f32 %v793, %v794
        %v890 = vmin.f32 %v795, %v796
        %v891 = vmin.f32 %v797, %v798
        %v892 = vmin.f32 %v799, %v800
        %v893 = vmin.f32 %v801, %v802
        %v894 = vmin.f32 %v803, %v804
        %v895 = vmin.f32 %v805, %v806
        %v896 = vmin.f32 %v807, %v808
        %v897 = vmin.f32 %v809, %v810
        %v898 = vmin.f32 %v811, %v812
        %v899 = vmin.f32 %v813, %v814
        %v900 = vmin.f32 %v815, %v816
        %v901 = vmin.f32 %v817, %v818
        %v902 = vld [vmem:[#allocation2] sm:$0xff]
        %v903 = vld [vmem:[#allocation2 + $0x8] sm:$0xff]
        %v904 = vld [vmem:[#allocation2 + $0x10] sm:$0xff]
        %v905 = vld [vmem:[#allocation2 + $0x18] sm:$0xff]
        %v906 = vld [vmem:[#allocation2 + $0x20] sm:$0xff]
        %v907 = vld [vmem:[#allocation2 + $0x28] sm:$0xff]
        %v908 = vld [vmem:[#allocation2 + $0x30] sm:$0xff]
        %v909 = vld [vmem:[#allocation2 + $0x38] sm:$0xff]
        %v910 = vld [vmem:[#allocation2 + $0x40] sm:$0xff]
        %v911 = vld [vmem:[#allocation2 + $0x48] sm:$0xff]
        %v912 = vld [vmem:[#allocation2 + $0x50] sm:$0xff]
        %v913 = vld [vmem:[#allocation2 + $0x58] sm:$0xff]
        %v914 = vld [vmem:[#allocation2 + $0x60] sm:$0xff]
        %v915 = vld [vmem:[#allocation2 + $0x68] sm:$0xff]
        %v916 = vld [vmem:[#allocation2 + $0x70] sm:$0xff]
        %v917 = vld [vmem:[#allocation2 + $0x78] sm:$0xff]
        %v918 = vmin.f32 %v902, %v886
        %v919 = vmin.f32 %v903, %v887
        %v920 = vmin.f32 %v904, %v888
        %v921 = vmin.f32 %v905, %v889
        %v922 = vmin.f32 %v906, %v890
        %v923 = vmin.f32 %v907, %v891
        %v924 = vmin.f32 %v908, %v892
        %v925 = vmin.f32 %v909, %v893
        %v926 = vmin.f32 %v910, %v894
        %v927 = vmin.f32 %v911, %v895
        %v928 = vmin.f32 %v912, %v896
        %v929 = vmin.f32 %v913, %v897
        %v930 = vmin.f32 %v914, %v898
        %v931 = vmin.f32 %v915, %v899
        %v932 = vmin.f32 %v916, %v900
        %v933 = vmin.f32 %v917, %v901
        %934 = vst [vmem:[#allocation2] sm:$0xff] %v918
        %935 = vst [vmem:[#allocation2 + $0x8] sm:$0xff] %v919
        %936 = vst [vmem:[#allocation2 + $0x10] sm:$0xff] %v920
        %937 = vst [vmem:[#allocation2 + $0x18] sm:$0xff] %v921
        %938 = vst [vmem:[#allocation2 + $0x20] sm:$0xff] %v922
        %939 = vst [vmem:[#allocation2 + $0x28] sm:$0xff] %v923
        %940 = vst [vmem:[#allocation2 + $0x30] sm:$0xff] %v924
        %941 = vst [vmem:[#allocation2 + $0x38] sm:$0xff] %v925
        %942 = vst [vmem:[#allocation2 + $0x40] sm:$0xff] %v926
        %943 = vst [vmem:[#allocation2 + $0x48] sm:$0xff] %v927
        %944 = vst [vmem:[#allocation2 + $0x50] sm:$0xff] %v928
        %945 = vst [vmem:[#allocation2 + $0x58] sm:$0xff] %v929
        %946 = vst [vmem:[#allocation2 + $0x60] sm:$0xff] %v930
        %947 = vst [vmem:[#allocation2 + $0x68] sm:$0xff] %v931
        %948 = vst [vmem:[#allocation2 + $0x70] sm:$0xff] %v932
        %949 = vst [vmem:[#allocation2 + $0x78] sm:$0xff] %v933
        %s950 = scalar_lea.vmem %s255, 8
        %v951 = vld [vmem:[%s950] sm:$0x77]
        %v953 = vlaneseq
        %v954 = vshrl.u32 %v953, 7
        %v955 = vsub.s32 0, %v954
        %v956 = vrot.slane %v951, %v955
        %v957 = vlaneseq
        %v958 = vshrl.u32 %v957, 7
        %v959 = vsub.s32 4, %v958
        %v960 = vrot.slane %v951, %v959
        %v963 = vlaneseq
        %v964 = vshrl.u32 %v963, 7
        %v965 = vsub.s32 0, %v964
        %v966 = vrot.slane %v956, %v965
        %v967 = vlaneseq
        %v968 = vshrl.u32 %v967, 7
        %v969 = vsub.s32 0, %v968
        %v970 = vrot.slane %v960, %v969
        %v971 = vsub.f32 %v303, %v966
        %v972 = vsub.f32 %v303, %v970
        %v973 = vsub.f32 %v308, %v966
        %v974 = vsub.f32 %v308, %v970
        %v975 = vsub.f32 %v313, %v966
        %v976 = vsub.f32 %v313, %v970
        %v977 = vsub.f32 %v318, %v966
        %v978 = vsub.f32 %v318, %v970
        %v979 = vsub.f32 %v323, %v966
        %v980 = vsub.f32 %v323, %v970
        %v981 = vsub.f32 %v328, %v966
        %v982 = vsub.f32 %v328, %v970
        %v983 = vsub.f32 %v333, %v966
        %v984 = vsub.f32 %v333, %v970
        %v985 = vsub.f32 %v338, %v966
        %v986 = vsub.f32 %v338, %v970
        %v987 = vsub.f32 %v343, %v966
        %v988 = vsub.f32 %v343, %v970
        %v989 = vsub.f32 %v348, %v966
        %v990 = vsub.f32 %v348, %v970
        %v991 = vsub.f32 %v353, %v966
        %v992 = vsub.f32 %v353, %v970
        %v993 = vsub.f32 %v358, %v966
        %v994 = vsub.f32 %v358, %v970
        %v995 = vsub.f32 %v363, %v966
        %v996 = vsub.f32 %v363, %v970
        %v997 = vsub.f32 %v368, %v966
        %v998 = vsub.f32 %v368, %v970
        %v999 = vsub.f32 %v373, %v966
        %v1000 = vsub.f32 %v373, %v970
        %v1001 = vsub.f32 %v378, %v966
        %v1002 = vsub.f32 %v378, %v970
        %v1003 = vmul.f32 %v971, %v971
        %v1004 = vmul.f32 %v972, %v972
        %v1005 = vmul.f32 %v973, %v973
        %v1006 = vmul.f32 %v974, %v974
        %v1007 = vmul.f32 %v975, %v975
        %v1008 = vmul.f32 %v976, %v976
        %v1009 = vmul.f32 %v977, %v977
        %v1010 = vmul.f32 %v978, %v978
        %v1011 = vmul.f32 %v979, %v979
        %v1012 = vmul.f32 %v980, %v980
        %v1013 = vmul.f32 %v981, %v981
        %v1014 = vmul.f32 %v982, %v982
        %v1015 = vmul.f32 %v983, %v983
        %v1016 = vmul.f32 %v984, %v984
        %v1017 = vmul.f32 %v985, %v985
        %v1018 = vmul.f32 %v986, %v986
        %v1019 = vmul.f32 %v987, %v987
        %v1020 = vmul.f32 %v988, %v988
        %v1021 = vmul.f32 %v989, %v989
        %v1022 = vmul.f32 %v990, %v990
        %v1023 = vmul.f32 %v991, %v991
        %v1024 = vmul.f32 %v992, %v992
        %v1025 = vmul.f32 %v993, %v993
        %v1026 = vmul.f32 %v994, %v994
        %v1027 = vmul.f32 %v995, %v995
        %v1028 = vmul.f32 %v996, %v996
        %v1029 = vmul.f32 %v997, %v997
        %v1030 = vmul.f32 %v998, %v998
        %v1031 = vmul.f32 %v999, %v999
        %v1032 = vmul.f32 %v1000, %v1000
        %v1033 = vmul.f32 %v1001, %v1001
        %v1034 = vmul.f32 %v1002, %v1002
        %v1035 = vlaneseq
        %v1036 = vshrl.u32 %v1035, 7
        %v1037 = vsub.s32 1, %v1036
        %v1038 = vrot.slane %v951, %v1037
        %v1039 = vlaneseq
        %v1040 = vshrl.u32 %v1039, 7
        %v1041 = vsub.s32 5, %v1040
        %v1042 = vrot.slane %v951, %v1041
        %v1045 = vlaneseq
        %v1046 = vshrl.u32 %v1045, 7
        %v1047 = vsub.s32 1, %v1046
        %v1048 = vrot.slane %v1038, %v1047
        %v1049 = vlaneseq
        %v1050 = vshrl.u32 %v1049, 7
        %v1051 = vsub.s32 1, %v1050
        %v1052 = vrot.slane %v1042, %v1051
        %v1053 = vsub.f32 %v465, %v1048
        %v1054 = vsub.f32 %v465, %v1052
        %v1055 = vsub.f32 %v469, %v1048
        %v1056 = vsub.f32 %v469, %v1052
        %v1057 = vsub.f32 %v473, %v1048
        %v1058 = vsub.f32 %v473, %v1052
        %v1059 = vsub.f32 %v477, %v1048
        %v1060 = vsub.f32 %v477, %v1052
        %v1061 = vsub.f32 %v481, %v1048
        %v1062 = vsub.f32 %v481, %v1052
        %v1063 = vsub.f32 %v485, %v1048
        %v1064 = vsub.f32 %v485, %v1052
        %v1065 = vsub.f32 %v489, %v1048
        %v1066 = vsub.f32 %v489, %v1052
        %v1067 = vsub.f32 %v493, %v1048
        %v1068 = vsub.f32 %v493, %v1052
        %v1069 = vsub.f32 %v497, %v1048
        %v1070 = vsub.f32 %v497, %v1052
        %v1071 = vsub.f32 %v501, %v1048
        %v1072 = vsub.f32 %v501, %v1052
        %v1073 = vsub.f32 %v505, %v1048
        %v1074 = vsub.f32 %v505, %v1052
        %v1075 = vsub.f32 %v509, %v1048
        %v1076 = vsub.f32 %v509, %v1052
        %v1077 = vsub.f32 %v513, %v1048
        %v1078 = vsub.f32 %v513, %v1052
        %v1079 = vsub.f32 %v517, %v1048
        %v1080 = vsub.f32 %v517, %v1052
        %v1081 = vsub.f32 %v521, %v1048
        %v1082 = vsub.f32 %v521, %v1052
        %v1083 = vsub.f32 %v525, %v1048
        %v1084 = vsub.f32 %v525, %v1052
        %v1085 = vmul.f32 %v1053, %v1053
        %v1086 = vmul.f32 %v1054, %v1054
        %v1087 = vmul.f32 %v1055, %v1055
        %v1088 = vmul.f32 %v1056, %v1056
        %v1089 = vmul.f32 %v1057, %v1057
        %v1090 = vmul.f32 %v1058, %v1058
        %v1091 = vmul.f32 %v1059, %v1059
        %v1092 = vmul.f32 %v1060, %v1060
        %v1093 = vmul.f32 %v1061, %v1061
        %v1094 = vmul.f32 %v1062, %v1062
        %v1095 = vmul.f32 %v1063, %v1063
        %v1096 = vmul.f32 %v1064, %v1064
        %v1097 = vmul.f32 %v1065, %v1065
        %v1098 = vmul.f32 %v1066, %v1066
        %v1099 = vmul.f32 %v1067, %v1067
        %v1100 = vmul.f32 %v1068, %v1068
        %v1101 = vmul.f32 %v1069, %v1069
        %v1102 = vmul.f32 %v1070, %v1070
        %v1103 = vmul.f32 %v1071, %v1071
        %v1104 = vmul.f32 %v1072, %v1072
        %v1105 = vmul.f32 %v1073, %v1073
        %v1106 = vmul.f32 %v1074, %v1074
        %v1107 = vmul.f32 %v1075, %v1075
        %v1108 = vmul.f32 %v1076, %v1076
        %v1109 = vmul.f32 %v1077, %v1077
        %v1110 = vmul.f32 %v1078, %v1078
        %v1111 = vmul.f32 %v1079, %v1079
        %v1112 = vmul.f32 %v1080, %v1080
        %v1113 = vmul.f32 %v1081, %v1081
        %v1114 = vmul.f32 %v1082, %v1082
        %v1115 = vmul.f32 %v1083, %v1083
        %v1116 = vmul.f32 %v1084, %v1084
        %v1117 = vadd.f32 %v1003, %v1085
        %v1118 = vadd.f32 %v1004, %v1086
        %v1119 = vadd.f32 %v1005, %v1087
        %v1120 = vadd.f32 %v1006, %v1088
        %v1121 = vadd.f32 %v1007, %v1089
        %v1122 = vadd.f32 %v1008, %v1090
        %v1123 = vadd.f32 %v1009, %v1091
        %v1124 = vadd.f32 %v1010, %v1092
        %v1125 = vadd.f32 %v1011, %v1093
        %v1126 = vadd.f32 %v1012, %v1094
        %v1127 = vadd.f32 %v1013, %v1095
        %v1128 = vadd.f32 %v1014, %v1096
        %v1129 = vadd.f32 %v1015, %v1097
        %v1130 = vadd.f32 %v1016, %v1098
        %v1131 = vadd.f32 %v1017, %v1099
        %v1132 = vadd.f32 %v1018, %v1100
        %v1133 = vadd.f32 %v1019, %v1101
        %v1134 = vadd.f32 %v1020, %v1102
        %v1135 = vadd.f32 %v1021, %v1103
        %v1136 = vadd.f32 %v1022, %v1104
        %v1137 = vadd.f32 %v1023, %v1105
        %v1138 = vadd.f32 %v1024, %v1106
        %v1139 = vadd.f32 %v1025, %v1107
        %v1140 = vadd.f32 %v1026, %v1108
        %v1141 = vadd.f32 %v1027, %v1109
        %v1142 = vadd.f32 %v1028, %v1110
        %v1143 = vadd.f32 %v1029, %v1111
        %v1144 = vadd.f32 %v1030, %v1112
        %v1145 = vadd.f32 %v1031, %v1113
        %v1146 = vadd.f32 %v1032, %v1114
        %v1147 = vadd.f32 %v1033, %v1115
        %v1148 = vadd.f32 %v1034, %v1116
        %v1149 = vlaneseq
        %v1150 = vshrl.u32 %v1149, 7
        %v1151 = vsub.s32 2, %v1150
        %v1152 = vrot.slane %v951, %v1151
        %v1153 = vlaneseq
        %v1154 = vshrl.u32 %v1153, 7
        %v1155 = vsub.s32 6, %v1154
        %v1156 = vrot.slane %v951, %v1155
        %v1159 = vlaneseq
        %v1160 = vshrl.u32 %v1159, 7
        %v1161 = vsub.s32 2, %v1160
        %v1162 = vrot.slane %v1152, %v1161
        %v1163 = vlaneseq
        %v1164 = vshrl.u32 %v1163, 7
        %v1165 = vsub.s32 2, %v1164
        %v1166 = vrot.slane %v1156, %v1165
        %v1167 = vsub.f32 %v643, %v1162
        %v1168 = vsub.f32 %v643, %v1166
        %v1169 = vsub.f32 %v647, %v1162
        %v1170 = vsub.f32 %v647, %v1166
        %v1171 = vsub.f32 %v651, %v1162
        %v1172 = vsub.f32 %v651, %v1166
        %v1173 = vsub.f32 %v655, %v1162
        %v1174 = vsub.f32 %v655, %v1166
        %v1175 = vsub.f32 %v659, %v1162
        %v1176 = vsub.f32 %v659, %v1166
        %v1177 = vsub.f32 %v663, %v1162
        %v1178 = vsub.f32 %v663, %v1166
        %v1179 = vsub.f32 %v667, %v1162
        %v1180 = vsub.f32 %v667, %v1166
        %v1181 = vsub.f32 %v671, %v1162
        %v1182 = vsub.f32 %v671, %v1166
        %v1183 = vsub.f32 %v675, %v1162
        %v1184 = vsub.f32 %v675, %v1166
        %v1185 = vsub.f32 %v679, %v1162
        %v1186 = vsub.f32 %v679, %v1166
        %v1187 = vsub.f32 %v683, %v1162
        %v1188 = vsub.f32 %v683, %v1166
        %v1189 = vsub.f32 %v687, %v1162
        %v1190 = vsub.f32 %v687, %v1166
        %v1191 = vsub.f32 %v691, %v1162
        %v1192 = vsub.f32 %v691, %v1166
        %v1193 = vsub.f32 %v695, %v1162
        %v1194 = vsub.f32 %v695, %v1166
        %v1195 = vsub.f32 %v699, %v1162
        %v1196 = vsub.f32 %v699, %v1166
        %v1197 = vsub.f32 %v703, %v1162
        %v1198 = vsub.f32 %v703, %v1166
        %v1199 = vmul.f32 %v1167, %v1167
        %v1200 = vmul.f32 %v1168, %v1168
        %v1201 = vmul.f32 %v1169, %v1169
        %v1202 = vmul.f32 %v1170, %v1170
        %v1203 = vmul.f32 %v1171, %v1171
        %v1204 = vmul.f32 %v1172, %v1172
        %v1205 = vmul.f32 %v1173, %v1173
        %v1206 = vmul.f32 %v1174, %v1174
        %v1207 = vmul.f32 %v1175, %v1175
        %v1208 = vmul.f32 %v1176, %v1176
        %v1209 = vmul.f32 %v1177, %v1177
        %v1210 = vmul.f32 %v1178, %v1178
        %v1211 = vmul.f32 %v1179, %v1179
        %v1212 = vmul.f32 %v1180, %v1180
        %v1213 = vmul.f32 %v1181, %v1181
        %v1214 = vmul.f32 %v1182, %v1182
        %v1215 = vmul.f32 %v1183, %v1183
        %v1216 = vmul.f32 %v1184, %v1184
        %v1217 = vmul.f32 %v1185, %v1185
        %v1218 = vmul.f32 %v1186, %v1186
        %v1219 = vmul.f32 %v1187, %v1187
        %v1220 = vmul.f32 %v1188, %v1188
        %v1221 = vmul.f32 %v1189, %v1189
        %v1222 = vmul.f32 %v1190, %v1190
        %v1223 = vmul.f32 %v1191, %v1191
        %v1224 = vmul.f32 %v1192, %v1192
        %v1225 = vmul.f32 %v1193, %v1193
        %v1226 = vmul.f32 %v1194, %v1194
        %v1227 = vmul.f32 %v1195, %v1195
        %v1228 = vmul.f32 %v1196, %v1196
        %v1229 = vmul.f32 %v1197, %v1197
        %v1230 = vmul.f32 %v1198, %v1198
        %v1231 = vadd.f32 %v1117, %v1199
        %v1232 = vadd.f32 %v1118, %v1200
        %v1233 = vadd.f32 %v1119, %v1201
        %v1234 = vadd.f32 %v1120, %v1202
        %v1235 = vadd.f32 %v1121, %v1203
        %v1236 = vadd.f32 %v1122, %v1204
        %v1237 = vadd.f32 %v1123, %v1205
        %v1238 = vadd.f32 %v1124, %v1206
        %v1239 = vadd.f32 %v1125, %v1207
        %v1240 = vadd.f32 %v1126, %v1208
        %v1241 = vadd.f32 %v1127, %v1209
        %v1242 = vadd.f32 %v1128, %v1210
        %v1243 = vadd.f32 %v1129, %v1211
        %v1244 = vadd.f32 %v1130, %v1212
        %v1245 = vadd.f32 %v1131, %v1213
        %v1246 = vadd.f32 %v1132, %v1214
        %v1247 = vadd.f32 %v1133, %v1215
        %v1248 = vadd.f32 %v1134, %v1216
        %v1249 = vadd.f32 %v1135, %v1217
        %v1250 = vadd.f32 %v1136, %v1218
        %v1251 = vadd.f32 %v1137, %v1219
        %v1252 = vadd.f32 %v1138, %v1220
        %v1253 = vadd.f32 %v1139, %v1221
        %v1254 = vadd.f32 %v1140, %v1222
        %v1255 = vadd.f32 %v1141, %v1223
        %v1256 = vadd.f32 %v1142, %v1224
        %v1257 = vadd.f32 %v1143, %v1225
        %v1258 = vadd.f32 %v1144, %v1226
        %v1259 = vadd.f32 %v1145, %v1227
        %v1260 = vadd.f32 %v1146, %v1228
        %v1261 = vadd.f32 %v1147, %v1229
        %v1262 = vadd.f32 %v1148, %v1230
        %v1263 = vmin.f32 %v1231, %v1233
        %v1264 = vmin.f32 %v1232, %v1234
        %v1265 = vmin.f32 %v1263, %v1235
        %v1266 = vmin.f32 %v1264, %v1236
        %v1267 = vmin.f32 %v1265, %v1237
        %v1268 = vmin.f32 %v1266, %v1238
        %v1269 = vmin.f32 %v1267, %v1239
        %v1270 = vmin.f32 %v1268, %v1240
        %v1271 = vmin.f32 %v1269, %v1241
        %v1272 = vmin.f32 %v1270, %v1242
        %v1273 = vmin.f32 %v1271, %v1243
        %v1274 = vmin.f32 %v1272, %v1244
        %v1275 = vmin.f32 %v1273, %v1245
        %v1276 = vmin.f32 %v1274, %v1246
        %v1277 = vmin.f32 %v1275, %v1247
        %v1278 = vmin.f32 %v1276, %v1248
        %v1279 = vmin.f32 %v1277, %v1249
        %v1280 = vmin.f32 %v1278, %v1250
        %v1281 = vmin.f32 %v1279, %v1251
        %v1282 = vmin.f32 %v1280, %v1252
        %v1283 = vmin.f32 %v1281, %v1253
        %v1284 = vmin.f32 %v1282, %v1254
        %v1285 = vmin.f32 %v1283, %v1255
        %v1286 = vmin.f32 %v1284, %v1256
        %v1287 = vmin.f32 %v1285, %v1257
        %v1288 = vmin.f32 %v1286, %v1258
        %v1289 = vmin.f32 %v1287, %v1259
        %v1290 = vmin.f32 %v1288, %v1260
        %v1291 = vmin.f32 %v1289, %v1261
        %v1292 = vmin.f32 %v1290, %v1262
        %v1293 = vrot.slane %v1291, 4
        %v1294 = vmin.f32 %v1291, %v1293
        %v1295 = vrot.slane %v1294, 2
        %v1296 = vmin.f32 %v1294, %v1295
        %v1297 = vrot.slane %v1296, 1
        %v1298 = vmin.f32 %v1296, %v1297
        %v1299 = vrot.slane %v1292, 4
        %v1300 = vmin.f32 %v1292, %v1299
        %v1301 = vrot.slane %v1300, 2
        %v1302 = vmin.f32 %v1300, %v1301
        %v1303 = vrot.slane %v1302, 1
        %v1304 = vmin.f32 %v1302, %v1303
        %s1305 = scalar_lea.vmem %s236, 2 [#allocation5]
        %v1306 = vld [vmem:[%s1305] sm:$0x3]
        %v1309 = vcombine.low %v1298, %v1304
        %v1311 = vunpack.c.l.s4 1966171168
        %v1312 = vunpack.c.0.s8 %v1311
        %v1313 = vlaneseq
        %v1314 = vshrl.u32 %v1313, 7
        %v1315 = vsub.s32 %v1312, %v1314
        %v1316 = vrot.slane %v1309, %v1315
        %v1318 = vunpack.c.l.s4 1966171168
        %v1319 = vunpack.c.0.s8 %v1318
        %v1320 = vlaneseq
        %v1321 = vshrl.u32 %v1320, 7
        %v1322 = vsub.s32 %v1319, %v1321
        %v1323 = vrot.slane %v1316, %v1322
        %v1325 = vmin.f32 %v1306, %v1323
        %1326 = vst.msk [vmem:[%s1305] sm:$0x3] %vm884, %v1325
        %v1327 = vmin.f32 %v1231, %v1232
        %v1328 = vmin.f32 %v1233, %v1234
        %v1329 = vmin.f32 %v1235, %v1236
        %v1330 = vmin.f32 %v1237, %v1238
        %v1331 = vmin.f32 %v1239, %v1240
        %v1332 = vmin.f32 %v1241, %v1242
        %v1333 = vmin.f32 %v1243, %v1244
        %v1334 = vmin.f32 %v1245, %v1246
        %v1335 = vmin.f32 %v1247, %v1248
        %v1336 = vmin.f32 %v1249, %v1250
        %v1337 = vmin.f32 %v1251, %v1252
        %v1338 = vmin.f32 %v1253, %v1254
        %v1339 = vmin.f32 %v1255, %v1256
        %v1340 = vmin.f32 %v1257, %v1258
        %v1341 = vmin.f32 %v1259, %v1260
        %v1342 = vmin.f32 %v1261, %v1262
        %v1343 = vld [vmem:[#allocation2] sm:$0xff]
        %v1344 = vld [vmem:[#allocation2 + $0x8] sm:$0xff]
        %v1345 = vld [vmem:[#allocation2 + $0x10] sm:$0xff]
        %v1346 = vld [vmem:[#allocation2 + $0x18] sm:$0xff]
        %v1347 = vld [vmem:[#allocation2 + $0x20] sm:$0xff]
        %v1348 = vld [vmem:[#allocation2 + $0x28] sm:$0xff]
        %v1349 = vld [vmem:[#allocation2 + $0x30] sm:$0xff]
        %v1350 = vld [vmem:[#allocation2 + $0x38] sm:$0xff]
        %v1351 = vld [vmem:[#allocation2 + $0x40] sm:$0xff]
        %v1352 = vld [vmem:[#allocation2 + $0x48] sm:$0xff]
        %v1353 = vld [vmem:[#allocation2 + $0x50] sm:$0xff]
        %v1354 = vld [vmem:[#allocation2 + $0x58] sm:$0xff]
        %v1355 = vld [vmem:[#allocation2 + $0x60] sm:$0xff]
        %v1356 = vld [vmem:[#allocation2 + $0x68] sm:$0xff]
        %v1357 = vld [vmem:[#allocation2 + $0x70] sm:$0xff]
        %v1358 = vld [vmem:[#allocation2 + $0x78] sm:$0xff]
        %v1359 = vmin.f32 %v1343, %v1327
        %v1360 = vmin.f32 %v1344, %v1328
        %v1361 = vmin.f32 %v1345, %v1329
        %v1362 = vmin.f32 %v1346, %v1330
        %v1363 = vmin.f32 %v1347, %v1331
        %v1364 = vmin.f32 %v1348, %v1332
        %v1365 = vmin.f32 %v1349, %v1333
        %v1366 = vmin.f32 %v1350, %v1334
        %v1367 = vmin.f32 %v1351, %v1335
        %v1368 = vmin.f32 %v1352, %v1336
        %v1369 = vmin.f32 %v1353, %v1337
        %v1370 = vmin.f32 %v1354, %v1338
        %v1371 = vmin.f32 %v1355, %v1339
        %v1372 = vmin.f32 %v1356, %v1340
        %v1373 = vmin.f32 %v1357, %v1341
        %v1374 = vmin.f32 %v1358, %v1342
        %1375 = vst [vmem:[#allocation2] sm:$0xff] %v1359
        %1376 = vst [vmem:[#allocation2 + $0x8] sm:$0xff] %v1360
        %1377 = vst [vmem:[#allocation2 + $0x10] sm:$0xff] %v1361
        %1378 = vst [vmem:[#allocation2 + $0x18] sm:$0xff] %v1362
        %1379 = vst [vmem:[#allocation2 + $0x20] sm:$0xff] %v1363
        %1380 = vst [vmem:[#allocation2 + $0x28] sm:$0xff] %v1364
        %1381 = vst [vmem:[#allocation2 + $0x30] sm:$0xff] %v1365
        %1382 = vst [vmem:[#allocation2 + $0x38] sm:$0xff] %v1366
        %1383 = vst [vmem:[#allocation2 + $0x40] sm:$0xff] %v1367
        %1384 = vst [vmem:[#allocation2 + $0x48] sm:$0xff] %v1368
        %1385 = vst [vmem:[#allocation2 + $0x50] sm:$0xff] %v1369
        %1386 = vst [vmem:[#allocation2 + $0x58] sm:$0xff] %v1370
        %1387 = vst [vmem:[#allocation2 + $0x60] sm:$0xff] %v1371
        %1388 = vst [vmem:[#allocation2 + $0x68] sm:$0xff] %v1372
        %1389 = vst [vmem:[#allocation2 + $0x70] sm:$0xff] %v1373
        %1390 = vst [vmem:[#allocation2 + $0x78] sm:$0xff] %v1374
        %v1391 = vld [vmem:[#allocation2] sm:$0xff]
        %v1392 = vld [vmem:[#allocation2 + $0x8] sm:$0xff]
        %v1393 = vld [vmem:[#allocation2 + $0x10] sm:$0xff]
        %v1394 = vld [vmem:[#allocation2 + $0x18] sm:$0xff]
        %v1395 = vld [vmem:[#allocation2 + $0x20] sm:$0xff]
        %v1396 = vld [vmem:[#allocation2 + $0x28] sm:$0xff]
        %v1397 = vld [vmem:[#allocation2 + $0x30] sm:$0xff]
        %v1398 = vld [vmem:[#allocation2 + $0x38] sm:$0xff]
        %v1399 = vld [vmem:[#allocation2 + $0x40] sm:$0xff]
        %v1400 = vld [vmem:[#allocation2 + $0x48] sm:$0xff]
        %v1401 = vld [vmem:[#allocation2 + $0x50] sm:$0xff]
        %v1402 = vld [vmem:[#allocation2 + $0x58] sm:$0xff]
        %v1403 = vld [vmem:[#allocation2 + $0x60] sm:$0xff]
        %v1404 = vld [vmem:[#allocation2 + $0x68] sm:$0xff]
        %v1405 = vld [vmem:[#allocation2 + $0x70] sm:$0xff]
        %v1406 = vld [vmem:[#allocation2 + $0x78] sm:$0xff]
        %1407 = vmin.xlane.f32.xlu0 %v1391
        %v1408 = vpop.xlane.xlu0 %1407
        %1409 = vmin.xlane.f32.xlu0 %v1392
        %v1410 = vpop.xlane.xlu0 %1409
        %1411 = vmin.xlane.f32.xlu0 %v1393
        %v1412 = vpop.xlane.xlu0 %1411
        %1413 = vmin.xlane.f32.xlu0 %v1394
        %v1414 = vpop.xlane.xlu0 %1413
        %1415 = vmin.xlane.f32.xlu0 %v1395
        %v1416 = vpop.xlane.xlu0 %1415
        %1417 = vmin.xlane.f32.xlu0 %v1396
        %v1418 = vpop.xlane.xlu0 %1417
        %1419 = vmin.xlane.f32.xlu0 %v1397
        %v1420 = vpop.xlane.xlu0 %1419
        %1421 = vmin.xlane.f32.xlu0 %v1398
        %v1422 = vpop.xlane.xlu0 %1421
        %1423 = vmin.xlane.f32.xlu0 %v1399
        %v1424 = vpop.xlane.xlu0 %1423
        %1425 = vmin.xlane.f32.xlu0 %v1400
        %v1426 = vpop.xlane.xlu0 %1425
        %1427 = vmin.xlane.f32.xlu0 %v1401
        %v1428 = vpop.xlane.xlu0 %1427
        %1429 = vmin.xlane.f32.xlu0 %v1402
        %v1430 = vpop.xlane.xlu0 %1429
        %1431 = vmin.xlane.f32.xlu0 %v1403
        %v1432 = vpop.xlane.xlu0 %1431
        %1433 = vmin.xlane.f32.xlu0 %v1404
        %v1434 = vpop.xlane.xlu0 %1433
        %1435 = vmin.xlane.f32.xlu0 %v1405
        %v1436 = vpop.xlane.xlu0 %1435
        %1437 = vmin.xlane.f32.xlu0 %v1406
        %v1438 = vpop.xlane.xlu0 %1437
        %v1455 = vlaneseq
        %v1456 = vand.u32 %v1455, 127
        %v1457 = vlaneseq
        %v1458 = vshrl.u32 %v1457, 7
        %v1459 = vsub.s32 %v1456, %v1458
        %v1460 = vrot.slane %v1408, %v1459
        %v1461 = vadd.s32 %v1456, 4294967288
        %v1462 = vlaneseq
        %v1463 = vshrl.u32 %v1462, 7
        %v1464 = vsub.s32 %v1461, %v1463
        %v1465 = vrot.slane %v1410, %v1464
        %vm1466 = vcmask 130112
        %v1467 = vsel %vm1466, %v1465, %v1460
        %v1468 = vadd.s32 %v1456, 4294967280
        %v1469 = vlaneseq
        %v1470 = vshrl.u32 %v1469, 7
        %v1471 = vsub.s32 %v1468, %v1470
        %v1472 = vrot.slane %v1412, %v1471
        %vm1473 = vcmask 195712
        %v1474 = vsel %vm1473, %v1472, %v1467
        %v1475 = vadd.s32 %v1456, 4294967272
        %v1476 = vlaneseq
        %v1477 = vshrl.u32 %v1476, 7
        %v1478 = vsub.s32 %v1475, %v1477
        %v1479 = vrot.slane %v1414, %v1478
        %vm1480 = vcmask 261312
        %v1481 = vsel %vm1480, %v1479, %v1474
        %v1482 = vadd.s32 %v1456, 4294967264
        %v1483 = vlaneseq
        %v1484 = vshrl.u32 %v1483, 7
        %v1485 = vsub.s32 %v1482, %v1484
        %v1486 = vrot.slane %v1416, %v1485
        %vm1487 = vcmask 326912
        %v1488 = vsel %vm1487, %v1486, %v1481
        %v1489 = vadd.s32 %v1456, 4294967256
        %v1490 = vlaneseq
        %v1491 = vshrl.u32 %v1490, 7
        %v1492 = vsub.s32 %v1489, %v1491
        %v1493 = vrot.slane %v1418, %v1492
        %vm1494 = vcmask 392512
        %v1495 = vsel %vm1494, %v1493, %v1488
        %v1496 = vadd.s32 %v1456, 4294967248
        %v1497 = vlaneseq
        %v1498 = vshrl.u32 %v1497, 7
        %v1499 = vsub.s32 %v1496, %v1498
        %v1500 = vrot.slane %v1420, %v1499
        %vm1501 = vcmask 458112
        %v1502 = vsel %vm1501, %v1500, %v1495
        %v1503 = vadd.s32 %v1456, 4294967240
        %v1504 = vlaneseq
        %v1505 = vshrl.u32 %v1504, 7
        %v1506 = vsub.s32 %v1503, %v1505
        %v1507 = vrot.slane %v1422, %v1506
        %vm1508 = vcmask 523712
        %v1509 = vsel %vm1508, %v1507, %v1502
        %v1510 = vadd.s32 %v1456, 4294967232
        %v1511 = vlaneseq
        %v1512 = vshrl.u32 %v1511, 7
        %v1513 = vsub.s32 %v1510, %v1512
        %v1514 = vrot.slane %v1424, %v1513
        %vm1515 = vcmask 589312
        %v1516 = vsel %vm1515, %v1514, %v1509
        %v1517 = vadd.s32 %v1456, 4294967224
        %v1518 = vlaneseq
        %v1519 = vshrl.u32 %v1518, 7
        %v1520 = vsub.s32 %v1517, %v1519
        %v1521 = vrot.slane %v1426, %v1520
        %vm1522 = vcmask 654912
        %v1523 = vsel %vm1522, %v1521, %v1516
        %v1524 = vadd.s32 %v1456, 4294967216
        %v1525 = vlaneseq
        %v1526 = vshrl.u32 %v1525, 7
        %v1527 = vsub.s32 %v1524, %v1526
        %v1528 = vrot.slane %v1428, %v1527
        %vm1529 = vcmask 720512
        %v1530 = vsel %vm1529, %v1528, %v1523
        %v1531 = vadd.s32 %v1456, 4294967208
        %v1532 = vlaneseq
        %v1533 = vshrl.u32 %v1532, 7
        %v1534 = vsub.s32 %v1531, %v1533
        %v1535 = vrot.slane %v1430, %v1534
        %vm1536 = vcmask 786112
        %v1537 = vsel %vm1536, %v1535, %v1530
        %v1538 = vadd.s32 %v1456, 4294967200
        %v1539 = vlaneseq
        %v1540 = vshrl.u32 %v1539, 7
        %v1541 = vsub.s32 %v1538, %v1540
        %v1542 = vrot.slane %v1432, %v1541
        %vm1543 = vcmask 851712
        %v1544 = vsel %vm1543, %v1542, %v1537
        %v1545 = vadd.s32 %v1456, 4294967192
        %v1546 = vlaneseq
        %v1547 = vshrl.u32 %v1546, 7
        %v1548 = vsub.s32 %v1545, %v1547
        %v1549 = vrot.slane %v1434, %v1548
        %vm1550 = vcmask 917312
        %v1551 = vsel %vm1550, %v1549, %v1544
        %v1552 = vadd.s32 %v1456, 4294967184
        %v1553 = vlaneseq
        %v1554 = vshrl.u32 %v1553, 7
        %v1555 = vsub.s32 %v1552, %v1554
        %v1556 = vrot.slane %v1436, %v1555
        %vm1557 = vcmask 982912
        %v1558 = vsel %vm1557, %v1556, %v1551
        %v1559 = vadd.s32 %v1456, 4294967176
        %v1560 = vlaneseq
        %v1561 = vshrl.u32 %v1560, 7
        %v1562 = vsub.s32 %v1559, %v1561
        %v1563 = vrot.slane %v1438, %v1562
        %vm1564 = vcmask 1048512
        %v1565 = vsel %vm1564, %v1563, %v1558
        %1567 = vst [vmem:[%s229] sm:$0x1] %v1565
        %s1568 = sand.u32 %s112, 1
        %s1569 = scalar_lea.sflag [#allocation4], %s1568
        %s1570 = sand.u32 %s112, 1
        %s1571 = scalar_lea.vmem [#allocation3], %s1570
        %s1572 = sand.u32 %s140, 1
        %s1573 = scalar_lea.sflag [#allocation6], %s1572
        %s1574 = sand.u32 %s140, 1
        %s1575 = smul.addr %s1574, 4
        %s1576 = scalar_lea.vmem [#allocation5], %s1575
        // Predicated region
        $region33: #{tpu_custom_call.1} parent=27 // pred_check
          %p1577 = pneg %p122
        $region34: #{tpu_custom_call.1} parent=27 // pred_check_branch
          %1579 = sbr.rel (%p1577) target = $region36
        $region35: #{tpu_custom_call.1} parent=27 // pred_region
          %s1580 = smul.u32 %s27, 3
          %s1581 = sadd.s32 %s1580, %s28
          %s1583 = ssub.s32 16, 16
          %1584 = vsyncadd %s1569, %s1583
          %s1585 = smul.addr %s26, 3
          %s1586 = sadd.s32 %s1581, %s1585
          %s1587 = smul.addr %s1586, 16
          %s1588 = scalar_lea.hbm %s2, %s1587
          %s1590 = sshll.u32 %s1571, 4
          %s1591 = int_to_ptr.vmem [resolvable:$true] %s1590
          %1593 = dma.vmem_to_hbm [thread:$0]  %s1591, 16, %s1588, %s1569
        $region36: #{tpu_custom_call.1} parent=27 // pred_fallthru
          _
        // Predicated region
        $region37: #{tpu_custom_call.1} parent=27 // pred_check
          %p1594 = pneg %p150
        $region38: #{tpu_custom_call.1} parent=27 // pred_check_branch
          %1596 = sbr.rel (%p1594) target = $region40
        $region39: #{tpu_custom_call.1} parent=27 // pred_region
          %s1598 = ssub.s32 64, 64
          %1599 = vsyncadd %s1573, %s1598
          %s1600 = smul.addr %s27, 4
          %s1601 = smul.addr %s26, 4
          %s1602 = sadd.s32 %s1600, %s1601
          %s1603 = smul.addr %s1602, 16
          %s1604 = scalar_lea.hbm %s3, %s1603
          %s1606 = sshll.u32 %s1576, 4
          %s1607 = int_to_ptr.vmem [resolvable:$true] %s1606
          %1609 = dma.vmem_to_hbm [thread:$0]  %s1607, 64, %s1604, %s1573
        $region40: #{tpu_custom_call.1} parent=27 // pred_fallthru
          _
      $region28: #{tpu_custom_call.1} parent=5 // pred_fallthru
        _
      %p1610 = scmp.le.s32.totalorder 2, %s16
      // Predicated region
      $region41: #{tpu_custom_call.1} parent=5 // pred_check
        %p1611 = pneg %p1610
      $region42: #{tpu_custom_call.1} parent=5 // pred_check_branch
        %1613 = sbr.rel (%p1611) target = $region44
      $region43: #{tpu_custom_call.1} parent=5 // pred_region
        %s1614 = ssub.s32 %s16, 2
        // Predicated region
        $region45: #{tpu_custom_call.1} parent=43 // pred_check
          %p1615 = pneg %p128
        $region46: #{tpu_custom_call.1} parent=43 // pred_check_branch
          %1617 = sbr.rel (%p1615) target = $region48
        $region47: #{tpu_custom_call.1} parent=43 // pred_region
          %s1618 = sand.u32 %s113, 1
          %s1619 = scalar_lea.sflag [#allocation4], %s1618
          %s1620 = sand.u32 %s113, 1
          %s1621 = scalar_lea.vmem [#allocation3], %s1620
          %1622 = dma.done %s1619, 16
        $region48: #{tpu_custom_call.1} parent=43 // pred_fallthru
          _
        // Predicated region
        $region49: #{tpu_custom_call.1} parent=43 // pred_check
          %p1623 = pneg %p156
        $region50: #{tpu_custom_call.1} parent=43 // pred_check_branch
          %1625 = sbr.rel (%p1623) target = $region52
        $region51: #{tpu_custom_call.1} parent=43 // pred_region
          %s1626 = sand.u32 %s141, 1
          %s1627 = scalar_lea.sflag [#allocation6], %s1626
          %s1628 = sand.u32 %s141, 1
          %s1629 = smul.addr %s1628, 4
          %s1630 = scalar_lea.vmem [#allocation5], %s1629
          %1631 = dma.done %s1627, 64
        $region52: #{tpu_custom_call.1} parent=43 // pred_fallthru
          _
      $region44: #{tpu_custom_call.1} parent=5 // pred_fallthru
        _
    $region6: #{tpu_custom_call.1} parent=1 // loop_footer
      %s20 = sadd.s32 1, %s16
    $region7: #{tpu_custom_call.1} parent=1 // loop_footer_branch
      %15 = sbr.rel target = $region3
    $region8: #{tpu_custom_call.1} parent=1 // loop_exit
      _
    %1632 = vsyncpa [#allocation4], 1
    %s1633 = scalar_lea.sflag [#allocation4], 1
    %1634 = vsyncpa %s1633, 1
    %1635 = vsyncpa [#allocation6], 1
    %s1636 = scalar_lea.sflag [#allocation6], 1
    %1637 = vsyncpa %s1636, 1

</llo_original>
